<compile_context>
chip_gen: v6e
topology: v6e:2x2x1
jax: 0.10.0
libtpu: 0.0.40
codegen_flags: <defaults>
</compile_context>

<pallas_src>
import functools

import jax
import jax.numpy as jnp
import numpy as np
from jax.experimental import pallas as pl
from jax.experimental.pallas import tpu as pltpu

LANE = 128  # TPU lane width; keep the output last dim a multiple of this.


def mlp_kernel(x_ref, w_in_ref, b_in_ref, rw1_ref, rb1_ref, rw2_ref, rb2_ref,
               w_out_ref, b_out_ref, o_ref, *, num_resblocks):
    """Whole MLP forward for one batch tile (all weights resident in VMEM).

    Weights arrive pre-cast to bf16 (native MXU input dtype); activations are
    cast to bf16 only at the dot inputs, with f32 accumulation and f32
    elementwise math (bias add / ReLU / residual).
    """
    # Input projection: Linear(input_dim, hidden) + ReLU
    h = jnp.maximum(
        jnp.dot(x_ref[...].astype(jnp.bfloat16), w_in_ref[...],
                preferred_element_type=jnp.float32)
        + b_in_ref[...],
        0.0,
    )
    # ResBlocks: relu( (Linear -> ReLU -> Dropout -> Linear)(h) + h )
    for i in range(num_resblocks):  # static unroll; num_resblocks is small
        y = jnp.maximum(
            jnp.dot(h.astype(jnp.bfloat16), rw1_ref[i],
                    preferred_element_type=jnp.float32)
            + rb1_ref[i],
            0.0,
        )
        # TODO(synk): nn.Dropout is identity in eval mode; train-mode dropout
        # (pltpu.prng_random_bits mask) not implemented.
        y = (jnp.dot(y.astype(jnp.bfloat16), rw2_ref[i],
                     preferred_element_type=jnp.float32)
             + rb2_ref[i])
        h = jnp.maximum(y + h, 0.0)
    # Output projection: Linear(hidden, output_dim_padded)
    o_ref[...] = (
        jnp.dot(h.astype(jnp.bfloat16), w_out_ref[...],
                preferred_element_type=jnp.float32)
        + b_out_ref[...]
    )


def _round_up(x, m):
    return (x + m - 1) // m * m


def mlp_forward(x, params, *, num_resblocks, bm=128):
    B, in_dim = x.shape
    hidden = params["w_in"].shape[1]
    out_dim = params["w_out"].shape[1]
    D = params["rw1"].shape[0]  # >= 1 (placeholder slab if num_resblocks == 0)

    # --- batch tile: pad B to a multiple of bm so the MXU M dim is full ----
    B_pad = _round_up(max(B, bm), bm)
    if B_pad != B:
        x = jnp.pad(x, ((0, B_pad - B), (0, 0)))

    # --- lane-dense output: pad out_dim up to a multiple of 128 ------------
    out_pad = _round_up(out_dim, LANE)
    w_out = jnp.pad(params["w_out"], ((0, 0), (0, out_pad - out_dim)))
    b_out = jnp.pad(params["b_out"], ((0, 0), (0, out_pad - out_dim)))

    # --- bf16 weights (MXU-native input dtype); biases stay f32 ------------
    bf16 = lambda a: a.astype(jnp.bfloat16)
    w_in, rw1, rw2, w_out = bf16(params["w_in"]), bf16(params["rw1"]), \
        bf16(params["rw2"]), bf16(w_out)
    b_in, rb1, rb2 = params["b_in"], params["rb1"], params["rb2"]

    kernel = functools.partial(mlp_kernel, num_resblocks=num_resblocks)

    grid = (B_pad // bm,)
    # Weights use the same (full-array) block at every grid step.  At these
    # sizes the default double-buffering of the (tiny) weight slabs is
    # negligible; at realistic hidden sizes stream one resblock's weights per
    # grid step along a second ("arbitrary") grid axis instead.
    full = lambda shape: pl.BlockSpec(shape, lambda i: (0,) * len(shape))

    out_full = pl.pallas_call(
        kernel,
        out_shape=jax.ShapeDtypeStruct((B_pad, out_pad), jnp.float32),
        grid_spec=pltpu.PrefetchScalarGridSpec(
            num_scalar_prefetch=0,
            grid=grid,
            in_specs=[
                pl.BlockSpec((bm, in_dim), lambda i: (i, 0)),  # x tile (f32)
                full((in_dim, hidden)),                        # w_in  (bf16)
                full((1, hidden)),                             # b_in  (f32)
                full((D, hidden, hidden)),                     # rw1   (bf16)
                full((D, 1, hidden)),                          # rb1   (f32)
                full((D, hidden, hidden)),                     # rw2   (bf16)
                full((D, 1, hidden)),                          # rb2   (f32)
                full((hidden, out_pad)),                       # w_out (bf16)
                full((1, out_pad)),                            # b_out (f32)
            ],
            out_specs=pl.BlockSpec((bm, out_pad), lambda i: (i, 0)),
        ),
        compiler_params=pltpu.CompilerParams(
            dimension_semantics=("parallel",),
            vmem_limit_bytes=64 * 1024 * 1024,
        ),
    )(x, w_in, b_in, rw1, rb1, rw2, rb2, w_out, b_out)

    return out_full[:B, :out_dim]


def mlp_reference(x, params, num_resblocks):
    """Pure-JAX reference mirroring the kernel's bf16-input / f32-accum math."""
    dot = lambda a, w: jnp.dot(a.astype(jnp.bfloat16), w.astype(jnp.bfloat16),
                               preferred_element_type=jnp.float32)
    h = jnp.maximum(dot(x, params["w_in"]) + params["b_in"], 0.0)
    for i in range(num_resblocks):
        y = jnp.maximum(dot(h, params["rw1"][i]) + params["rb1"][i], 0.0)
        y = dot(y, params["rw2"][i]) + params["rb2"][i]
        h = jnp.maximum(y + h, 0.0)
    return dot(h, params["w_out"]) + params["b_out"]


def init_params(key, input_dim, hidden_dim, output_dim, hidden_depth):
    """Deterministic synthetic init (uniform, fan-in scaled like nn.Linear)."""
    D = hidden_depth - 1
    ks = jax.random.split(key, 8)

    def lin(k, fan_in, fan_out):
        bound = 1.0 / np.sqrt(fan_in)
        kw, kb = jax.random.split(k)
        w = jax.random.uniform(kw, (fan_in, fan_out), jnp.float32, -bound, bound)
        b = jax.random.uniform(kb, (1, fan_out), jnp.float32, -bound, bound)
        return w, b

    w_in, b_in = lin(ks[0], input_dim, hidden_dim)
    w_out, b_out = lin(ks[1], hidden_dim, output_dim)

    if D == 0:
        # Placeholder slabs so BlockSpecs stay well-formed; kernel never reads them.
        rw = jnp.zeros((1, hidden_dim, hidden_dim), jnp.float32)
        rb = jnp.zeros((1, 1, hidden_dim), jnp.float32)
        return {"w_in": w_in, "b_in": b_in, "rw1": rw, "rb1": rb,
                "rw2": rw, "rb2": rb, "w_out": w_out, "b_out": b_out}

    rw1, rb1, rw2, rb2 = [], [], [], []
    rk = jax.random.split(ks[2], D)
    for i in range(D):
        k1, k2 = jax.random.split(rk[i])
        w1, b1 = lin(k1, hidden_dim, hidden_dim)
        w2, b2 = lin(k2, hidden_dim, hidden_dim)
        rw1.append(w1); rb1.append(b1[None]); rw2.append(w2); rb2.append(b2[None])

    return {
        "w_in": w_in, "b_in": b_in,
        "rw1": jnp.stack(rw1), "rb1": jnp.concatenate(rb1, axis=0),
        "rw2": jnp.stack(rw2), "rb2": jnp.concatenate(rb2, axis=0),
        "w_out": w_out, "b_out": b_out,
    }


if __name__ == "__main__":
    # Shapes consistent with MLP(input_dim, hidden_dim, output_dim,
    # hidden_depth, dropout); x: (batch, input_dim).  batch=256 with bm=128
    # gives a 2-step parallel grid (balanced across both v7x TensorCores).
    batch, input_dim, hidden_dim, output_dim, hidden_depth = 256, 16, 32, 8, 3
    num_resblocks = hidden_depth - 1

    key = jax.random.PRNGKey(0)
    kx, kp = jax.random.split(key)
    x = jax.random.normal(kx, (batch, input_dim), jnp.float32)
    params = init_params(kp, input_dim, hidden_dim, output_dim, hidden_depth)

    out = mlp_forward(x, params, num_resblocks=num_resblocks, bm=128)
    out = jax.block_until_ready(out)

    ref = jax.block_until_ready(mlp_reference(x, params, num_resblocks))
    np.testing.assert_allclose(np.asarray(out), np.asarray(ref),
                               rtol=1e-2, atol=1e-2)
    print("KERNEL_OK")
</pallas_src>

<mosaic_0001>
module attributes {stable_mosaic.version = 11 : i64} {
  func.func @mlp_kernel(%arg0: i32, %arg1: memref<128x16xf32, #tpu.memory_space<vmem>>, %arg2: memref<16x32xbf16, #tpu.memory_space<vmem>>, %arg3: memref<1x32xf32, #tpu.memory_space<vmem>>, %arg4: memref<2x32x32xbf16, #tpu.memory_space<vmem>>, %arg5: memref<2x1x32xf32, #tpu.memory_space<vmem>>, %arg6: memref<2x32x32xbf16, #tpu.memory_space<vmem>>, %arg7: memref<2x1x32xf32, #tpu.memory_space<vmem>>, %arg8: memref<32x128xbf16, #tpu.memory_space<vmem>>, %arg9: memref<1x128xf32, #tpu.memory_space<vmem>>, %arg10: memref<128x128xf32, #tpu.memory_space<vmem>>) attributes {dimension_semantics = [#tpu.dimension_semantics<parallel>], iteration_bounds = array<i64: 2>, scalar_prefetch = 0 : i64, scratch_operands = 0 : i64, tpu.core_type = #tpu.core_type<tc>, window_params = [{transform_indices = @transform_0, window_bounds = array<i64: 128, 16>}, {pipeline_mode = #tpu.pipeline_mode<synchronous>, transform_indices = @transform_1, window_bounds = array<i64: 16, 32>}, {pipeline_mode = #tpu.pipeline_mode<synchronous>, transform_indices = @transform_2, window_bounds = array<i64: 1, 32>}, {pipeline_mode = #tpu.pipeline_mode<synchronous>, transform_indices = @transform_3, window_bounds = array<i64: 2, 32, 32>}, {pipeline_mode = #tpu.pipeline_mode<synchronous>, transform_indices = @transform_4, window_bounds = array<i64: 2, 1, 32>}, {pipeline_mode = #tpu.pipeline_mode<synchronous>, transform_indices = @transform_5, window_bounds = array<i64: 2, 32, 32>}, {pipeline_mode = #tpu.pipeline_mode<synchronous>, transform_indices = @transform_6, window_bounds = array<i64: 2, 1, 32>}, {pipeline_mode = #tpu.pipeline_mode<synchronous>, transform_indices = @transform_7, window_bounds = array<i64: 32, 128>}, {pipeline_mode = #tpu.pipeline_mode<synchronous>, transform_indices = @transform_8, window_bounds = array<i64: 1, 128>}, {transform_indices = @transform_9, window_bounds = array<i64: 128, 128>}]} {
    %c0 = arith.constant 0 : index
    %c0_0 = arith.constant 0 : index
    %0 = vector.load %arg1[%c0, %c0_0] : memref<128x16xf32, #tpu.memory_space<vmem>>, vector<128x16xf32>
    %1 = arith.truncf %0 : vector<128x16xf32> to vector<128x16xbf16>
    %c0_1 = arith.constant 0 : index
    %c0_2 = arith.constant 0 : index
    %2 = vector.load %arg2[%c0_1, %c0_2] : memref<16x32xbf16, #tpu.memory_space<vmem>>, vector<16x32xbf16>
    %cst = arith.constant dense<0.000000e+00> : vector<128x32xf32>
    %3 = tpu.matmul %1, %2, %cst {dimension_numbers = #tpu.dot_dimension_numbers<[1], [0], [0], [1], [0, 0, 1, 1], [], []>} : vector<128x16xbf16>, vector<16x32xbf16>, vector<128x32xf32> -> vector<128x32xf32>
    %c0_3 = arith.constant 0 : index
    %c0_4 = arith.constant 0 : index
    %4 = vector.load %arg3[%c0_3, %c0_4] : memref<1x32xf32, #tpu.memory_space<vmem>>, vector<1x32xf32>
    %5 = vector.broadcast %4 : vector<1x32xf32> to vector<128x32xf32>
    %6 = arith.addf %3, %5 : vector<128x32xf32>
    %cst_5 = arith.constant 0.000000e+00 : f32
    %7 = vector.broadcast %cst_5 : f32 to vector<128x32xf32>
    %8 = arith.maximumf %6, %7 : vector<128x32xf32>
    %9 = arith.truncf %8 : vector<128x32xf32> to vector<128x32xbf16>
    %c0_6 = arith.constant 0 : index
    %c0_7 = arith.constant 0 : index
    %c0_8 = arith.constant 0 : index
    %10 = vector.load %arg4[%c0_6, %c0_7, %c0_8] : memref<2x32x32xbf16, #tpu.memory_space<vmem>>, vector<1x32x32xbf16>
    %11 = vector.shape_cast %10 : vector<1x32x32xbf16> to vector<32x32xbf16>
    %cst_9 = arith.constant dense<0.000000e+00> : vector<128x32xf32>
    %12 = tpu.matmul %9, %11, %cst_9 {dimension_numbers = #tpu.dot_dimension_numbers<[1], [0], [0], [1], [0, 0, 1, 1], [], []>} : vector<128x32xbf16>, vector<32x32xbf16>, vector<128x32xf32> -> vector<128x32xf32>
    %c0_10 = arith.constant 0 : index
    %c0_11 = arith.constant 0 : index
    %c0_12 = arith.constant 0 : index
    %13 = vector.load %arg5[%c0_10, %c0_11, %c0_12] : memref<2x1x32xf32, #tpu.memory_space<vmem>>, vector<1x1x32xf32>
    %14 = vector.shape_cast %13 : vector<1x1x32xf32> to vector<1x32xf32>
    %15 = vector.broadcast %14 : vector<1x32xf32> to vector<128x32xf32>
    %16 = arith.addf %12, %15 : vector<128x32xf32>
    %cst_13 = arith.constant 0.000000e+00 : f32
    %17 = vector.broadcast %cst_13 : f32 to vector<128x32xf32>
    %18 = arith.maximumf %16, %17 : vector<128x32xf32>
    %19 = arith.truncf %18 : vector<128x32xf32> to vector<128x32xbf16>
    %c0_14 = arith.constant 0 : index
    %c0_15 = arith.constant 0 : index
    %c0_16 = arith.constant 0 : index
    %20 = vector.load %arg6[%c0_14, %c0_15, %c0_16] : memref<2x32x32xbf16, #tpu.memory_space<vmem>>, vector<1x32x32xbf16>
    %21 = vector.shape_cast %20 : vector<1x32x32xbf16> to vector<32x32xbf16>
    %cst_17 = arith.constant dense<0.000000e+00> : vector<128x32xf32>
    %22 = tpu.matmul %19, %21, %cst_17 {dimension_numbers = #tpu.dot_dimension_numbers<[1], [0], [0], [1], [0, 0, 1, 1], [], []>} : vector<128x32xbf16>, vector<32x32xbf16>, vector<128x32xf32> -> vector<128x32xf32>
    %c0_18 = arith.constant 0 : index
    %c0_19 = arith.constant 0 : index
    %c0_20 = arith.constant 0 : index
    %23 = vector.load %arg7[%c0_18, %c0_19, %c0_20] : memref<2x1x32xf32, #tpu.memory_space<vmem>>, vector<1x1x32xf32>
    %24 = vector.shape_cast %23 : vector<1x1x32xf32> to vector<1x32xf32>
    %25 = vector.broadcast %24 : vector<1x32xf32> to vector<128x32xf32>
    %26 = arith.addf %22, %25 : vector<128x32xf32>
    %27 = arith.addf %26, %8 : vector<128x32xf32>
    %cst_21 = arith.constant 0.000000e+00 : f32
    %28 = vector.broadcast %cst_21 : f32 to vector<128x32xf32>
    %29 = arith.maximumf %27, %28 : vector<128x32xf32>
    %30 = arith.truncf %29 : vector<128x32xf32> to vector<128x32xbf16>
    %c1 = arith.constant 1 : index
    %c0_22 = arith.constant 0 : index
    %c0_23 = arith.constant 0 : index
    %31 = vector.load %arg4[%c1, %c0_22, %c0_23] : memref<2x32x32xbf16, #tpu.memory_space<vmem>>, vector<1x32x32xbf16>
    %32 = vector.shape_cast %31 : vector<1x32x32xbf16> to vector<32x32xbf16>
    %cst_24 = arith.constant dense<0.000000e+00> : vector<128x32xf32>
    %33 = tpu.matmul %30, %32, %cst_24 {dimension_numbers = #tpu.dot_dimension_numbers<[1], [0], [0], [1], [0, 0, 1, 1], [], []>} : vector<128x32xbf16>, vector<32x32xbf16>, vector<128x32xf32> -> vector<128x32xf32>
    %c1_25 = arith.constant 1 : index
    %c0_26 = arith.constant 0 : index
    %c0_27 = arith.constant 0 : index
    %34 = vector.load %arg5[%c1_25, %c0_26, %c0_27] : memref<2x1x32xf32, #tpu.memory_space<vmem>>, vector<1x1x32xf32>
    %35 = vector.shape_cast %34 : vector<1x1x32xf32> to vector<1x32xf32>
    %36 = vector.broadcast %35 : vector<1x32xf32> to vector<128x32xf32>
    %37 = arith.addf %33, %36 : vector<128x32xf32>
    %cst_28 = arith.constant 0.000000e+00 : f32
    %38 = vector.broadcast %cst_28 : f32 to vector<128x32xf32>
    %39 = arith.maximumf %37, %38 : vector<128x32xf32>
    %40 = arith.truncf %39 : vector<128x32xf32> to vector<128x32xbf16>
    %c1_29 = arith.constant 1 : index
    %c0_30 = arith.constant 0 : index
    %c0_31 = arith.constant 0 : index
    %41 = vector.load %arg6[%c1_29, %c0_30, %c0_31] : memref<2x32x32xbf16, #tpu.memory_space<vmem>>, vector<1x32x32xbf16>
    %42 = vector.shape_cast %41 : vector<1x32x32xbf16> to vector<32x32xbf16>
    %cst_32 = arith.constant dense<0.000000e+00> : vector<128x32xf32>
    %43 = tpu.matmul %40, %42, %cst_32 {dimension_numbers = #tpu.dot_dimension_numbers<[1], [0], [0], [1], [0, 0, 1, 1], [], []>} : vector<128x32xbf16>, vector<32x32xbf16>, vector<128x32xf32> -> vector<128x32xf32>
    %c1_33 = arith.constant 1 : index
    %c0_34 = arith.constant 0 : index
    %c0_35 = arith.constant 0 : index
    %44 = vector.load %arg7[%c1_33, %c0_34, %c0_35] : memref<2x1x32xf32, #tpu.memory_space<vmem>>, vector<1x1x32xf32>
    %45 = vector.shape_cast %44 : vector<1x1x32xf32> to vector<1x32xf32>
    %46 = vector.broadcast %45 : vector<1x32xf32> to vector<128x32xf32>
    %47 = arith.addf %43, %46 : vector<128x32xf32>
    %48 = arith.addf %47, %29 : vector<128x32xf32>
    %cst_36 = arith.constant 0.000000e+00 : f32
    %49 = vector.broadcast %cst_36 : f32 to vector<128x32xf32>
    %50 = arith.maximumf %48, %49 : vector<128x32xf32>
    %51 = arith.truncf %50 : vector<128x32xf32> to vector<128x32xbf16>
    %c0_37 = arith.constant 0 : index
    %c0_38 = arith.constant 0 : index
    %52 = vector.load %arg8[%c0_37, %c0_38] : memref<32x128xbf16, #tpu.memory_space<vmem>>, vector<32x128xbf16>
    %cst_39 = arith.constant dense<0.000000e+00> : vector<128x128xf32>
    %53 = tpu.matmul %51, %52, %cst_39 {dimension_numbers = #tpu.dot_dimension_numbers<[1], [0], [0], [1], [0, 0, 1, 1], [], []>} : vector<128x32xbf16>, vector<32x128xbf16>, vector<128x128xf32> -> vector<128x128xf32>
    %c0_40 = arith.constant 0 : index
    %c0_41 = arith.constant 0 : index
    %54 = vector.load %arg9[%c0_40, %c0_41] : memref<1x128xf32, #tpu.memory_space<vmem>>, vector<1x128xf32>
    %55 = vector.broadcast %54 : vector<1x128xf32> to vector<128x128xf32>
    %56 = arith.addf %53, %55 : vector<128x128xf32>
    %c0_42 = arith.constant 0 : index
    %c0_43 = arith.constant 0 : index
    %57 = vector.load %arg10[%c0_42, %c0_43] : memref<128x128xf32, #tpu.memory_space<vmem>>, vector<128x128xf32>
    tpu.vector_store %arg10[%c0_42, %c0_43], %56 {strides = array<i32>} : memref<128x128xf32, #tpu.memory_space<vmem>>, vector<128x128xf32>,
    return
  }
  func.func @transform_0(%arg0: i32) -> (i32, i32) {
    %c0_i32 = arith.constant 0 : i32
    %c0_i32_0 = arith.constant 0 : i32
    return %arg0, %c0_i32 : i32, i32
  }
  func.func @transform_1(%arg0: i32) -> (i32, i32) {
    %c0_i32 = arith.constant 0 : i32
    %c0_i32_0 = arith.constant 0 : i32
    %c0_i32_1 = arith.constant 0 : i32
    return %c0_i32, %c0_i32_0 : i32, i32
  }
  func.func @transform_2(%arg0: i32) -> (i32, i32) {
    %c0_i32 = arith.constant 0 : i32
    %c0_i32_0 = arith.constant 0 : i32
    %c0_i32_1 = arith.constant 0 : i32
    return %c0_i32, %c0_i32_0 : i32, i32
  }
  func.func @transform_3(%arg0: i32) -> (i32, i32, i32) {
    %c0_i32 = arith.constant 0 : i32
    %c0_i32_0 = arith.constant 0 : i32
    %c0_i32_1 = arith.constant 0 : i32
    %c0_i32_2 = arith.constant 0 : i32
    return %c0_i32, %c0_i32_0, %c0_i32_1 : i32, i32, i32
  }
  func.func @transform_4(%arg0: i32) -> (i32, i32, i32) {
    %c0_i32 = arith.constant 0 : i32
    %c0_i32_0 = arith.constant 0 : i32
    %c0_i32_1 = arith.constant 0 : i32
    %c0_i32_2 = arith.constant 0 : i32
    return %c0_i32, %c0_i32_0, %c0_i32_1 : i32, i32, i32
  }
  func.func @transform_5(%arg0: i32) -> (i32, i32, i32) {
    %c0_i32 = arith.constant 0 : i32
    %c0_i32_0 = arith.constant 0 : i32
    %c0_i32_1 = arith.constant 0 : i32
    %c0_i32_2 = arith.constant 0 : i32
    return %c0_i32, %c0_i32_0, %c0_i32_1 : i32, i32, i32
  }
  func.func @transform_6(%arg0: i32) -> (i32, i32, i32) {
    %c0_i32 = arith.constant 0 : i32
    %c0_i32_0 = arith.constant 0 : i32
    %c0_i32_1 = arith.constant 0 : i32
    %c0_i32_2 = arith.constant 0 : i32
    return %c0_i32, %c0_i32_0, %c0_i32_1 : i32, i32, i32
  }
  func.func @transform_7(%arg0: i32) -> (i32, i32) {
    %c0_i32 = arith.constant 0 : i32
    %c0_i32_0 = arith.constant 0 : i32
    %c0_i32_1 = arith.constant 0 : i32
    return %c0_i32, %c0_i32_0 : i32, i32
  }
  func.func @transform_8(%arg0: i32) -> (i32, i32) {
    %c0_i32 = arith.constant 0 : i32
    %c0_i32_0 = arith.constant 0 : i32
    %c0_i32_1 = arith.constant 0 : i32
    return %c0_i32, %c0_i32_0 : i32, i32
  }
  func.func @transform_9(%arg0: i32) -> (i32, i32) {
    %c0_i32 = arith.constant 0 : i32
    %c0_i32_0 = arith.constant 0 : i32
    return %arg0, %c0_i32 : i32, i32
  }
}

</mosaic_0001>

<llo_original>
// kernel: tpu_custom_call.1
$region0: #{tpu_custom_call.1}
  #allocation0 [shape = 'u32[]', space=smem, size = 0x4, offset = 0x4, fixed_abs, tag = 'smem constant byte address 0x4 - core index']
  #allocation1 [shape = 'u32[144,128]{1,0:T(1,128)}', space=vmem, size = 0x12000, scoped, tag = 'internal scratch']
  %s0 = inlined_call_operand.vmem [shape: f32[256,16], index: 0, kind: input, shape index: {}]
  %s1 = inlined_call_operand.vmem [shape: bf16[16,32], index: 1, kind: input, shape index: {}]
  %s2 = inlined_call_operand.vmem [shape: f32[1,32], index: 2, kind: input, shape index: {}]
  %s3 = inlined_call_operand.vmem [shape: bf16[2,32,32], index: 3, kind: input, shape index: {}]
  %s4 = inlined_call_operand.vmem [shape: f32[2,1,32], index: 4, kind: input, shape index: {}]
  %s5 = inlined_call_operand.vmem [shape: bf16[2,32,32], index: 5, kind: input, shape index: {}]
  %s6 = inlined_call_operand.vmem [shape: f32[2,1,32], index: 6, kind: input, shape index: {}]
  %s7 = inlined_call_operand.vmem [shape: bf16[32,128], index: 7, kind: input, shape index: {}]
  %s8 = inlined_call_operand.vmem [shape: f32[1,128], index: 8, kind: input, shape index: {}]
  %s9 = inlined_call_operand.hbm [shape: f32[256,128], index: 9, kind: output, shape index: {}]
  %s10 = sld [smem:[#allocation0]]
  $region69: #{tpu_custom_call.1} parent=0
    _
  %s12 = ssub.s32 1, %s10
  %s13 = scalar_select 0, %s12, %s10
  $region1: #{tpu_custom_call.1} parent=0
    #allocation2 [shape = 'u8[131072]{0}', space=vmem, size = 0x20000, scoped, tag = 'output window, operand 0']
    #allocation3 [shape = 's32[2]{0}', space=sflag, size = 0x8, scoped, tag = 'scoped memory for tpu_custom_call.1']
    %14 = vsyncpa [#allocation3], 0
    %s15 = scalar_lea.sflag [#allocation3], 1
    %16 = vsyncpa %s15, 0
    loop: start=0, step=1, limit=4
    $region2: #{tpu_custom_call.1} parent=1 // loop_pre_header
      _
    $region3: #{tpu_custom_call.1} parent=1 // loop_header
      %s18 = sphi 0, %s22
      %p19 = scmp.ge.s32.totalorder %s18, 4
      %s28 = sphi 0, %s30
      %s31 = sphi 0, %s28
      %s32 = sphi 0, %s31
      %s48 = sphi 0, %s32
      %s52 = sphi 0, %s52
      %s54 = sphi 0, %s52
      %s55 = sphi 0, %s54
      %s69 = sphi 0, %s55
      %s73 = sphi 0, %s73
      %s75 = sphi 0, %s73
      %s76 = sphi 0, %s75
      %s90 = sphi 0, %s76
      %s94 = sphi 0, %s94
      %s96 = sphi 0, %s94
      %s97 = sphi 0, %s96
      %s111 = sphi 0, %s97
      %s115 = sphi 0, %s115
      %s117 = sphi 0, %s115
      %s118 = sphi 0, %s117
      %s132 = sphi 0, %s118
      %s136 = sphi 0, %s136
      %s138 = sphi 0, %s136
      %s139 = sphi 0, %s138
      %s153 = sphi 0, %s139
      %s157 = sphi 0, %s157
      %s159 = sphi 0, %s157
      %s160 = sphi 0, %s159
      %s174 = sphi 0, %s160
      %s178 = sphi 0, %s178
      %s180 = sphi 0, %s178
      %s181 = sphi 0, %s180
      %s195 = sphi 0, %s181
      %s199 = sphi 0, %s199
      %s201 = sphi 0, %s199
      %s202 = sphi 0, %s201
      %s216 = sphi 0, %s202
      %s222 = sphi 0, %s224
      %s225 = sphi 0, %s222
      %s226 = sphi 0, %s225
      %s242 = sphi 0, %s226
    $region4: #{tpu_custom_call.1} parent=1 // loop_header_branch
      %21 = sbr.rel (%p19) target = $region8
    $region5: #{tpu_custom_call.1} parent=1 // loop_body
      %s23 = ssub.s32 %s18, 1
      %s24 = ssub.s32 %s18, 2
      %s25 = sadd.s32 %s18, 1
      %s26 = ssub.s32 %s18, %s25
      %p27 = scmp.eq.s32.totalorder %s26, 0
      %s29 = sadd.s32 %s28, 1
      %s30 = scalar_select %p27, %s28, %s29
      %p33 = pneg %p27
      %p34 = scmp.eq.s32.totalorder %s18, 1
      %p35 = por %p33, %p34
      %p36 = scmp.ne.s32.totalorder %s28, %s31
      %p37 = scmp.eq.s32.totalorder %s18, 0
      %p38 = por %p36, %p37
      %p39 = scmp.ne.s32.totalorder %s28, %s31
      %p40 = scmp.eq.s32.totalorder %s23, 1
      %p41 = por %p39, %p40
      %p42 = scmp.ne.s32.totalorder %s31, %s32
      %p43 = scmp.eq.s32.totalorder %s23, 0
      %p44 = por %p42, %p43
      %p45 = scmp.ne.s32.totalorder %s31, %s32
      %p46 = scmp.eq.s32.totalorder %s24, 1
      %p47 = por %p45, %p46
      %p49 = scmp.ne.s32.totalorder %s32, %s48
      %p50 = scmp.eq.s32.totalorder %s24, 0
      %p51 = por %p49, %p50
      %s53 = sadd.s32 %s52, 1
      %p56 = scmp.eq.s32.totalorder %s18, 1
      %p57 = scmp.ne.s32.totalorder %s52, %s54
      %p58 = scmp.eq.s32.totalorder %s18, 0
      %p59 = por %p57, %p58
      %p60 = scmp.ne.s32.totalorder %s52, %s54
      %p61 = scmp.eq.s32.totalorder %s23, 1
      %p62 = por %p60, %p61
      %p63 = scmp.ne.s32.totalorder %s54, %s55
      %p64 = scmp.eq.s32.totalorder %s23, 0
      %p65 = por %p63, %p64
      %p66 = scmp.ne.s32.totalorder %s54, %s55
      %p67 = scmp.eq.s32.totalorder %s24, 1
      %p68 = por %p66, %p67
      %p70 = scmp.ne.s32.totalorder %s55, %s69
      %p71 = scmp.eq.s32.totalorder %s24, 0
      %p72 = por %p70, %p71
      %s74 = sadd.s32 %s73, 1
      %p77 = scmp.eq.s32.totalorder %s18, 1
      %p78 = scmp.ne.s32.totalorder %s73, %s75
      %p79 = scmp.eq.s32.totalorder %s18, 0
      %p80 = por %p78, %p79
      %p81 = scmp.ne.s32.totalorder %s73, %s75
      %p82 = scmp.eq.s32.totalorder %s23, 1
      %p83 = por %p81, %p82
      %p84 = scmp.ne.s32.totalorder %s75, %s76
      %p85 = scmp.eq.s32.totalorder %s23, 0
      %p86 = por %p84, %p85
      %p87 = scmp.ne.s32.totalorder %s75, %s76
      %p88 = scmp.eq.s32.totalorder %s24, 1
      %p89 = por %p87, %p88
      %p91 = scmp.ne.s32.totalorder %s76, %s90
      %p92 = scmp.eq.s32.totalorder %s24, 0
      %p93 = por %p91, %p92
      %s95 = sadd.s32 %s94, 1
      %p98 = scmp.eq.s32.totalorder %s18, 1
      %p99 = scmp.ne.s32.totalorder %s94, %s96
      %p100 = scmp.eq.s32.totalorder %s18, 0
      %p101 = por %p99, %p100
      %p102 = scmp.ne.s32.totalorder %s94, %s96
      %p103 = scmp.eq.s32.totalorder %s23, 1
      %p104 = por %p102, %p103
      %p105 = scmp.ne.s32.totalorder %s96, %s97
      %p106 = scmp.eq.s32.totalorder %s23, 0
      %p107 = por %p105, %p106
      %p108 = scmp.ne.s32.totalorder %s96, %s97
      %p109 = scmp.eq.s32.totalorder %s24, 1
      %p110 = por %p108, %p109
      %p112 = scmp.ne.s32.totalorder %s97, %s111
      %p113 = scmp.eq.s32.totalorder %s24, 0
      %p114 = por %p112, %p113
      %s116 = sadd.s32 %s115, 1
      %p119 = scmp.eq.s32.totalorder %s18, 1
      %p120 = scmp.ne.s32.totalorder %s115, %s117
      %p121 = scmp.eq.s32.totalorder %s18, 0
      %p122 = por %p120, %p121
      %p123 = scmp.ne.s32.totalorder %s115, %s117
      %p124 = scmp.eq.s32.totalorder %s23, 1
      %p125 = por %p123, %p124
      %p126 = scmp.ne.s32.totalorder %s117, %s118
      %p127 = scmp.eq.s32.totalorder %s23, 0
      %p128 = por %p126, %p127
      %p129 = scmp.ne.s32.totalorder %s117, %s118
      %p130 = scmp.eq.s32.totalorder %s24, 1
      %p131 = por %p129, %p130
      %p133 = scmp.ne.s32.totalorder %s118, %s132
      %p134 = scmp.eq.s32.totalorder %s24, 0
      %p135 = por %p133, %p134
      %s137 = sadd.s32 %s136, 1
      %p140 = scmp.eq.s32.totalorder %s18, 1
      %p141 = scmp.ne.s32.totalorder %s136, %s138
      %p142 = scmp.eq.s32.totalorder %s18, 0
      %p143 = por %p141, %p142
      %p144 = scmp.ne.s32.totalorder %s136, %s138
      %p145 = scmp.eq.s32.totalorder %s23, 1
      %p146 = por %p144, %p145
      %p147 = scmp.ne.s32.totalorder %s138, %s139
      %p148 = scmp.eq.s32.totalorder %s23, 0
      %p149 = por %p147, %p148
      %p150 = scmp.ne.s32.totalorder %s138, %s139
      %p151 = scmp.eq.s32.totalorder %s24, 1
      %p152 = por %p150, %p151
      %p154 = scmp.ne.s32.totalorder %s139, %s153
      %p155 = scmp.eq.s32.totalorder %s24, 0
      %p156 = por %p154, %p155
      %s158 = sadd.s32 %s157, 1
      %p161 = scmp.eq.s32.totalorder %s18, 1
      %p162 = scmp.ne.s32.totalorder %s157, %s159
      %p163 = scmp.eq.s32.totalorder %s18, 0
      %p164 = por %p162, %p163
      %p165 = scmp.ne.s32.totalorder %s157, %s159
      %p166 = scmp.eq.s32.totalorder %s23, 1
      %p167 = por %p165, %p166
      %p168 = scmp.ne.s32.totalorder %s159, %s160
      %p169 = scmp.eq.s32.totalorder %s23, 0
      %p170 = por %p168, %p169
      %p171 = scmp.ne.s32.totalorder %s159, %s160
      %p172 = scmp.eq.s32.totalorder %s24, 1
      %p173 = por %p171, %p172
      %p175 = scmp.ne.s32.totalorder %s160, %s174
      %p176 = scmp.eq.s32.totalorder %s24, 0
      %p177 = por %p175, %p176
      %s179 = sadd.s32 %s178, 1
      %p182 = scmp.eq.s32.totalorder %s18, 1
      %p183 = scmp.ne.s32.totalorder %s178, %s180
      %p184 = scmp.eq.s32.totalorder %s18, 0
      %p185 = por %p183, %p184
      %p186 = scmp.ne.s32.totalorder %s178, %s180
      %p187 = scmp.eq.s32.totalorder %s23, 1
      %p188 = por %p186, %p187
      %p189 = scmp.ne.s32.totalorder %s180, %s181
      %p190 = scmp.eq.s32.totalorder %s23, 0
      %p191 = por %p189, %p190
      %p192 = scmp.ne.s32.totalorder %s180, %s181
      %p193 = scmp.eq.s32.totalorder %s24, 1
      %p194 = por %p192, %p193
      %p196 = scmp.ne.s32.totalorder %s181, %s195
      %p197 = scmp.eq.s32.totalorder %s24, 0
      %p198 = por %p196, %p197
      %s200 = sadd.s32 %s199, 1
      %p203 = scmp.eq.s32.totalorder %s18, 1
      %p204 = scmp.ne.s32.totalorder %s199, %s201
      %p205 = scmp.eq.s32.totalorder %s18, 0
      %p206 = por %p204, %p205
      %p207 = scmp.ne.s32.totalorder %s199, %s201
      %p208 = scmp.eq.s32.totalorder %s23, 1
      %p209 = por %p207, %p208
      %p210 = scmp.ne.s32.totalorder %s201, %s202
      %p211 = scmp.eq.s32.totalorder %s23, 0
      %p212 = por %p210, %p211
      %p213 = scmp.ne.s32.totalorder %s201, %s202
      %p214 = scmp.eq.s32.totalorder %s24, 1
      %p215 = por %p213, %p214
      %p217 = scmp.ne.s32.totalorder %s202, %s216
      %p218 = scmp.eq.s32.totalorder %s24, 0
      %p219 = por %p217, %p218
      %s220 = ssub.s32 %s18, %s25
      %p221 = scmp.eq.s32.totalorder %s220, 0
      %s223 = sadd.s32 %s222, 1
      %s224 = scalar_select %p221, %s222, %s223
      %p227 = pneg %p221
      %p228 = scmp.eq.s32.totalorder %s18, 1
      %p229 = por %p227, %p228
      %p230 = scmp.ne.s32.totalorder %s222, %s225
      %p231 = scmp.eq.s32.totalorder %s18, 0
      %p232 = por %p230, %p231
      %p233 = scmp.ne.s32.totalorder %s222, %s225
      %p234 = scmp.eq.s32.totalorder %s23, 1
      %p235 = por %p233, %p234
      %p236 = scmp.ne.s32.totalorder %s225, %s226
      %p237 = scmp.eq.s32.totalorder %s23, 0
      %p238 = por %p236, %p237
      %p239 = scmp.ne.s32.totalorder %s225, %s226
      %p240 = scmp.eq.s32.totalorder %s24, 1
      %p241 = por %p239, %p240
      %p243 = scmp.ne.s32.totalorder %s226, %s242
      %p244 = scmp.eq.s32.totalorder %s24, 0
      %p245 = por %p243, %p244
      %p246 = scmp.le.s32.totalorder 1, %s18
      %p247 = scmp.lt.s32.totalorder %s18, 3
      %p248 = pnand %p246, %p247
      %p249 = pneg %p248
      // Predicated region
      $region9: #{tpu_custom_call.1} parent=5 // pred_check
        _
      $region10: #{tpu_custom_call.1} parent=5 // pred_check_branch
        %251 = sbr.rel (%p248) target = $region12
      $region11: #{tpu_custom_call.1} parent=5 // pred_region
        %s252 = ssub.s32 %s18, 1
        // Predicated region
        $region13: #{tpu_custom_call.1} parent=11 // pred_check
          %p253 = pneg %p65
        $region14: #{tpu_custom_call.1} parent=11 // pred_check_branch
          %255 = sbr.rel (%p253) target = $region16
        $region15: #{tpu_custom_call.1} parent=11 // pred_region
          _
        $region16: #{tpu_custom_call.1} parent=11 // pred_fallthru
          _
        // Predicated region
        $region17: #{tpu_custom_call.1} parent=11 // pred_check
          %p256 = pneg %p86
        $region18: #{tpu_custom_call.1} parent=11 // pred_check_branch
          %258 = sbr.rel (%p256) target = $region20
        $region19: #{tpu_custom_call.1} parent=11 // pred_region
          _
        $region20: #{tpu_custom_call.1} parent=11 // pred_fallthru
          _
        // Predicated region
        $region21: #{tpu_custom_call.1} parent=11 // pred_check
          %p259 = pneg %p107
        $region22: #{tpu_custom_call.1} parent=11 // pred_check_branch
          %261 = sbr.rel (%p259) target = $region24
        $region23: #{tpu_custom_call.1} parent=11 // pred_region
          _
        $region24: #{tpu_custom_call.1} parent=11 // pred_fallthru
          _
        // Predicated region
        $region25: #{tpu_custom_call.1} parent=11 // pred_check
          %p262 = pneg %p128
        $region26: #{tpu_custom_call.1} parent=11 // pred_check_branch
          %264 = sbr.rel (%p262) target = $region28
        $region27: #{tpu_custom_call.1} parent=11 // pred_region
          _
        $region28: #{tpu_custom_call.1} parent=11 // pred_fallthru
          _
        // Predicated region
        $region29: #{tpu_custom_call.1} parent=11 // pred_check
          %p265 = pneg %p149
        $region30: #{tpu_custom_call.1} parent=11 // pred_check_branch
          %267 = sbr.rel (%p265) target = $region32
        $region31: #{tpu_custom_call.1} parent=11 // pred_region
          _
        $region32: #{tpu_custom_call.1} parent=11 // pred_fallthru
          _
        // Predicated region
        $region33: #{tpu_custom_call.1} parent=11 // pred_check
          %p268 = pneg %p170
        $region34: #{tpu_custom_call.1} parent=11 // pred_check_branch
          %270 = sbr.rel (%p268) target = $region36
        $region35: #{tpu_custom_call.1} parent=11 // pred_region
          _
        $region36: #{tpu_custom_call.1} parent=11 // pred_fallthru
          _
        // Predicated region
        $region37: #{tpu_custom_call.1} parent=11 // pred_check
          %p271 = pneg %p191
        $region38: #{tpu_custom_call.1} parent=11 // pred_check_branch
          %273 = sbr.rel (%p271) target = $region40
        $region39: #{tpu_custom_call.1} parent=11 // pred_region
          _
        $region40: #{tpu_custom_call.1} parent=11 // pred_fallthru
          _
        // Predicated region
        $region41: #{tpu_custom_call.1} parent=11 // pred_check
          %p274 = pneg %p212
        $region42: #{tpu_custom_call.1} parent=11 // pred_check_branch
          %276 = sbr.rel (%p274) target = $region44
        $region43: #{tpu_custom_call.1} parent=11 // pred_region
          _
        $region44: #{tpu_custom_call.1} parent=11 // pred_fallthru
          _
      $region12: #{tpu_custom_call.1} parent=5 // pred_fallthru
        _
      %p277 = scmp.lt.s32.totalorder %s18, 2
      // Predicated region
      $region45: #{tpu_custom_call.1} parent=5 // pred_check
        %p278 = pneg %p277
      $region46: #{tpu_custom_call.1} parent=5 // pred_check_branch
        %280 = sbr.rel (%p278) target = $region48
      $region47: #{tpu_custom_call.1} parent=5 // pred_region
        // Predicated region
        $region49: #{tpu_custom_call.1} parent=47 // pred_check
          %p281 = pneg %p38
        $region50: #{tpu_custom_call.1} parent=47 // pred_check_branch
          %283 = sbr.rel (%p281) target = $region52
        $region51: #{tpu_custom_call.1} parent=47 // pred_region
          %s284 = smul.u32 16, %s18
          %p285 = scmp.lt.s32.totalorder %s284, 31
          %s286 = scalar_select %p285, %s284, 31
          %s287 = smul.addr %s286, 8
          %s288 = scalar_lea.vmem %s0, %s287
          %s289 = smul.u32 16, %s18
        $region52: #{tpu_custom_call.1} parent=47 // pred_fallthru
          _
      $region48: #{tpu_custom_call.1} parent=5 // pred_fallthru
        _
      %p290 = scmp.le.s32.totalorder 1, %s18
      %p291 = scmp.lt.s32.totalorder %s18, 3
      %p292 = pnand %p290, %p291
      %p293 = pneg %p292
      // Predicated region
      $region53: #{tpu_custom_call.1} parent=5 // pred_check
        _
      $region54: #{tpu_custom_call.1} parent=5 // pred_check_branch
        %295 = sbr.rel (%p292) target = $region56
      $region55: #{tpu_custom_call.1} parent=5 // pred_region
        %s296 = ssub.s32 %s18, 1
        %s297 = smul.u32 16, %s23
        %p298 = scmp.lt.s32.totalorder %s297, 31
        %s299 = scalar_select %p298, %s297, 31
        %s300 = smul.addr %s299, 8
        %s301 = scalar_lea.vmem %s0, %s300
        %p302 = pneg %p44
        %p303 = pneg %p41
        %p304 = pneg %p65
        %p305 = pneg %p62
        %p306 = pneg %p86
        %p307 = pneg %p83
        %p308 = pneg %p107
        %p309 = pneg %p104
        %p310 = pneg %p128
        %p311 = pneg %p125
        %p312 = pneg %p149
        %p313 = pneg %p146
        %p314 = pneg %p170
        %p315 = pneg %p167
        %p316 = pneg %p191
        %p317 = pneg %p188
        %p318 = pneg %p212
        %p319 = pneg %p209
        %p320 = pneg %p238
        %p321 = pneg %p235
        %s322 = sand.u32 %s225, 1
        %s323 = scalar_lea.sflag [#allocation3], %s322
        %s324 = sand.u32 %s225, 1
        %s325 = smul.addr %s324, 128
        %s326 = scalar_lea.vmem [#allocation2], %s325
        %s327 = smul.u32 16, %s23
        %p328 = scmp.lt.s32.totalorder %s327, 31
        %s329 = scalar_select %p328, %s327, 31
        %s330 = smul.addr %s329, 8
        %s331 = scalar_lea.vmem %s0, %s330
        %s332 = smul.u32 16, %s23
        %s333 = smul.u32 16, %s23
        %v335 = vld [vmem:[%s331] sm:$0xff]
        %v336 = vld [vmem:[%s331 + $0x8] sm:$0xff]
        %v337 = vld [vmem:[%s331 + $0x10] sm:$0xff]
        %v338 = vld [vmem:[%s331 + $0x18] sm:$0xff]
        %v339 = vld [vmem:[%s331 + $0x20] sm:$0xff]
        %v340 = vld [vmem:[%s331 + $0x28] sm:$0xff]
        %v341 = vld [vmem:[%s331 + $0x30] sm:$0xff]
        %v342 = vld [vmem:[%s331 + $0x38] sm:$0xff]
        %v343 = vld [vmem:[%s331 + $0x40] sm:$0xff]
        %v344 = vld [vmem:[%s331 + $0x48] sm:$0xff]
        %v345 = vld [vmem:[%s331 + $0x50] sm:$0xff]
        %v346 = vld [vmem:[%s331 + $0x58] sm:$0xff]
        %v347 = vld [vmem:[%s331 + $0x60] sm:$0xff]
        %v348 = vld [vmem:[%s331 + $0x68] sm:$0xff]
        %v349 = vld [vmem:[%s331 + $0x70] sm:$0xff]
        %v350 = vld [vmem:[%s331 + $0x78] sm:$0xff]
        %v351 = vpack.c.bf16 %v336, %v335
        %v352 = vpack.c.bf16 %v338, %v337
        %v353 = vpack.c.bf16 %v340, %v339
        %v354 = vpack.c.bf16 %v342, %v341
        %v355 = vpack.c.bf16 %v344, %v343
        %v356 = vpack.c.bf16 %v346, %v345
        %v357 = vpack.c.bf16 %v348, %v347
        %v358 = vpack.c.bf16 %v350, %v349
        %v359 = vld [vmem:[%s1] sm:$0xf]
        %v360 = vld [vmem:[%s1 + $0x4] sm:$0xf]
        %v361 = vld [vmem:[%s2] sm:$0x1]
        %v363 = vlaneseq
        %v364 = vshrl.u32 %v363, 7
        %v365 = vsub.s32 0, %v364
        %v366 = vrot.slane %v361, %v365
        %v370 = vunpack.c.l.b16 %v359
        %v371 = vunpack.c.l.b16 %v360
        %v372 = vpack.c.b16 %v371, %v370
        %vm374 = vcmask 130048
        %v376 = vsel %vm374, %v351, 0
        %v379 = vsel %vm374, %v352, 0
        %v382 = vsel %vm374, %v353, 0
        %v385 = vsel %vm374, %v354, 0
        %v388 = vsel %vm374, %v355, 0
        %v391 = vsel %vm374, %v356, 0
        %v394 = vsel %vm374, %v357, 0
        %v397 = vsel %vm374, %v358, 0
        %399 = vmatprep.subr.bf16.mxu0 0
        %400 = vmatpush1.bf16.msra.mxu0 0
        %401 = vmatprep.subr.bf16.mxu0 0
        %402 = vmatpush1.bf16.msra.mxu0 0
        %403 = vmatprep.subr.bf16.mxu0 0
        %404 = vmatpush1.bf16.msra.mxu0 0
        %405 = vmatprep.subr.bf16.mxu0 0
        %406 = vmatpush1.bf16.msra.mxu0 0
        %407 = vmatprep.subr.bf16.mxu0 0
        %408 = vmatpush1.bf16.msra.mxu0 0
        %409 = vmatprep.subr.bf16.mxu0 0
        %410 = vmatpush1.bf16.msra.mxu0 0
        %411 = vmatprep.subr.bf16.mxu0 0
        %412 = vmatpush1.bf16.msra.mxu0 0
        %413 = vmatprep.subr.bf16.mxu0 0
        %414 = vmatpush1.bf16.msra.mxu0 %v372
        %415 = vmatprep.subr.bf16.mxu0 0
        %416 = vmatpush2.bf16.msra.mxu0 0
        %417 = vmatprep.subr.bf16.mxu0 0
        %418 = vmatpush2.bf16.msra.mxu0 0
        %419 = vmatprep.subr.bf16.mxu0 0
        %420 = vmatpush2.bf16.msra.mxu0 0
        %421 = vmatprep.subr.bf16.mxu0 0
        %422 = vmatpush2.bf16.msra.mxu0 0
        %423 = vmatprep.subr.bf16.mxu0 0
        %424 = vmatpush2.bf16.msra.mxu0 0
        %425 = vmatprep.subr.bf16.mxu0 0
        %426 = vmatpush2.bf16.msra.mxu0 0
        %427 = vmatprep.subr.bf16.mxu0 0
        %428 = vmatpush2.bf16.msra.mxu0 0
        %429 = vmatprep.subr.bf16.mxu0 0
        %430 = vmatpush2.bf16.msra.mxu0 0
        %431 = vmatprep.mubr.bf16.mxu0 0
        %432 = vmatmul.mubr.bf16.gmra.mxu0 %v376
        %v433 = vpop.f32.mrf.mxu0
        %v434 = vadd.f32 %v366, %v433
        %v435 = vpop.f32.mrf.mxu0
        %v436 = vpop.f32.mrf.mxu0
        %v437 = vadd.f32 %v366, %v436
        %v438 = vpop.f32.mrf.mxu0
        %439 = vmatprep.mubr.bf16.mxu0 0
        %440 = vmatmul.mubr.bf16.gmra.mxu0 %v379
        %v441 = vpop.f32.mrf.mxu0
        %v442 = vadd.f32 %v366, %v441
        %v443 = vpop.f32.mrf.mxu0
        %v444 = vpop.f32.mrf.mxu0
        %v445 = vadd.f32 %v366, %v444
        %v446 = vpop.f32.mrf.mxu0
        %447 = vmatprep.mubr.bf16.mxu0 0
        %448 = vmatmul.mubr.bf16.gmra.mxu0 %v382
        %v449 = vpop.f32.mrf.mxu0
        %v450 = vadd.f32 %v366, %v449
        %v451 = vpop.f32.mrf.mxu0
        %v452 = vpop.f32.mrf.mxu0
        %v453 = vadd.f32 %v366, %v452
        %v454 = vpop.f32.mrf.mxu0
        %455 = vmatprep.mubr.bf16.mxu0 0
        %456 = vmatmul.mubr.bf16.gmra.mxu0 %v385
        %v457 = vpop.f32.mrf.mxu0
        %v458 = vadd.f32 %v366, %v457
        %v459 = vpop.f32.mrf.mxu0
        %v460 = vpop.f32.mrf.mxu0
        %v461 = vadd.f32 %v366, %v460
        %v462 = vpop.f32.mrf.mxu0
        %463 = vmatprep.mubr.bf16.mxu0 0
        %464 = vmatmul.mubr.bf16.gmra.mxu0 %v388
        %v465 = vpop.f32.mrf.mxu0
        %v466 = vadd.f32 %v366, %v465
        %v467 = vpop.f32.mrf.mxu0
        %v468 = vpop.f32.mrf.mxu0
        %v469 = vadd.f32 %v366, %v468
        %v470 = vpop.f32.mrf.mxu0
        %471 = vmatprep.mubr.bf16.mxu0 0
        %472 = vmatmul.mubr.bf16.gmra.mxu0 %v391
        %v473 = vpop.f32.mrf.mxu0
        %v474 = vadd.f32 %v366, %v473
        %v475 = vpop.f32.mrf.mxu0
        %v476 = vpop.f32.mrf.mxu0
        %v477 = vadd.f32 %v366, %v476
        %v478 = vpop.f32.mrf.mxu0
        %479 = vmatprep.mubr.bf16.mxu0 0
        %480 = vmatmul.mubr.bf16.gmra.mxu0 %v394
        %v481 = vpop.f32.mrf.mxu0
        %v482 = vadd.f32 %v366, %v481
        %v483 = vpop.f32.mrf.mxu0
        %v484 = vpop.f32.mrf.mxu0
        %v485 = vadd.f32 %v366, %v484
        %v486 = vpop.f32.mrf.mxu0
        %487 = vmatprep.mubr.bf16.mxu0 0
        %488 = vmatmul.mubr.bf16.gmra.mxu0 %v397
        %v489 = vpop.f32.mrf.mxu0
        %v490 = vadd.f32 %v366, %v489
        %v491 = vpop.f32.mrf.mxu0
        %v492 = vpop.f32.mrf.mxu0
        %v493 = vadd.f32 %v366, %v492
        %v494 = vpop.f32.mrf.mxu0
        %495 = vdwg.mxu0
        %v496 = vmax.f32 %v434, 0.0
        %v497 = vmax.f32 %v437, 0.0
        %v498 = vmax.f32 %v442, 0.0
        %v499 = vmax.f32 %v445, 0.0
        %v500 = vmax.f32 %v450, 0.0
        %v501 = vmax.f32 %v453, 0.0
        %v502 = vmax.f32 %v458, 0.0
        %v503 = vmax.f32 %v461, 0.0
        %v504 = vmax.f32 %v466, 0.0
        %v505 = vmax.f32 %v469, 0.0
        %v506 = vmax.f32 %v474, 0.0
        %v507 = vmax.f32 %v477, 0.0
        %v508 = vmax.f32 %v482, 0.0
        %v509 = vmax.f32 %v485, 0.0
        %v510 = vmax.f32 %v490, 0.0
        %v511 = vmax.f32 %v493, 0.0
        %v512 = vpack.c.bf16 %v497, %v496
        %v513 = vpack.c.bf16 %v499, %v498
        %v514 = vpack.c.bf16 %v501, %v500
        %v515 = vpack.c.bf16 %v503, %v502
        %v516 = vpack.c.bf16 %v505, %v504
        %v517 = vpack.c.bf16 %v507, %v506
        %v518 = vpack.c.bf16 %v509, %v508
        %v519 = vpack.c.bf16 %v511, %v510
        %v520 = vld [vmem:[%s3] sm:$0xf]
        %v521 = vld [vmem:[%s3 + $0x4] sm:$0xf]
        %v522 = vld [vmem:[%s3 + $0x8] sm:$0xf]
        %v523 = vld [vmem:[%s3 + $0xc] sm:$0xf]
        %v524 = vld [vmem:[%s4] sm:$0x1]
        %v526 = vlaneseq
        %v527 = vshrl.u32 %v526, 7
        %v528 = vsub.s32 0, %v527
        %v529 = vrot.slane %v524, %v528
        %v535 = vunpack.c.l.b16 %v520
        %v536 = vunpack.c.l.b16 %v521
        %v537 = vunpack.c.l.b16 %v522
        %v538 = vunpack.c.l.b16 %v523
        %v539 = vpack.c.b16 %v536, %v535
        %v540 = vpack.c.b16 %v538, %v537
        %vm543 = vcmask 261120
        %v545 = vsel %vm543, %v512, 0
        %v548 = vsel %vm543, %v513, 0
        %v551 = vsel %vm543, %v514, 0
        %v554 = vsel %vm543, %v515, 0
        %v557 = vsel %vm543, %v516, 0
        %v560 = vsel %vm543, %v517, 0
        %v563 = vsel %vm543, %v518, 0
        %v566 = vsel %vm543, %v519, 0
        %568 = vmatprep.subr.bf16.mxu0 0
        %569 = vmatpush1.bf16.msra.mxu0 0
        %570 = vmatprep.subr.bf16.mxu0 0
        %571 = vmatpush1.bf16.msra.mxu0 0
        %572 = vmatprep.subr.bf16.mxu0 0
        %573 = vmatpush1.bf16.msra.mxu0 0
        %574 = vmatprep.subr.bf16.mxu0 0
        %575 = vmatpush1.bf16.msra.mxu0 0
        %576 = vmatprep.subr.bf16.mxu0 0
        %577 = vmatpush1.bf16.msra.mxu0 0
        %578 = vmatprep.subr.bf16.mxu0 0
        %579 = vmatpush1.bf16.msra.mxu0 0
        %580 = vmatprep.subr.bf16.mxu0 0
        %581 = vmatpush1.bf16.msra.mxu0 %v540
        %582 = vmatprep.subr.bf16.mxu0 0
        %583 = vmatpush1.bf16.msra.mxu0 %v539
        %584 = vmatprep.subr.bf16.mxu0 0
        %585 = vmatpush2.bf16.msra.mxu0 0
        %586 = vmatprep.subr.bf16.mxu0 0
        %587 = vmatpush2.bf16.msra.mxu0 0
        %588 = vmatprep.subr.bf16.mxu0 0
        %589 = vmatpush2.bf16.msra.mxu0 0
        %590 = vmatprep.subr.bf16.mxu0 0
        %591 = vmatpush2.bf16.msra.mxu0 0
        %592 = vmatprep.subr.bf16.mxu0 0
        %593 = vmatpush2.bf16.msra.mxu0 0
        %594 = vmatprep.subr.bf16.mxu0 0
        %595 = vmatpush2.bf16.msra.mxu0 0
        %596 = vmatprep.subr.bf16.mxu0 0
        %597 = vmatpush2.bf16.msra.mxu0 0
        %598 = vmatprep.subr.bf16.mxu0 0
        %599 = vmatpush2.bf16.msra.mxu0 0
        %600 = vmatprep.mubr.bf16.mxu0 0
        %601 = vmatmul.mubr.bf16.gmra.mxu0 %v545
        %v602 = vpop.f32.mrf.mxu0
        %v603 = vadd.f32 %v529, %v602
        %v604 = vpop.f32.mrf.mxu0
        %v605 = vpop.f32.mrf.mxu0
        %v606 = vadd.f32 %v529, %v605
        %v607 = vpop.f32.mrf.mxu0
        %608 = vmatprep.mubr.bf16.mxu0 0
        %609 = vmatmul.mubr.bf16.gmra.mxu0 %v548
        %v610 = vpop.f32.mrf.mxu0
        %v611 = vadd.f32 %v529, %v610
        %v612 = vpop.f32.mrf.mxu0
        %v613 = vpop.f32.mrf.mxu0
        %v614 = vadd.f32 %v529, %v613
        %v615 = vpop.f32.mrf.mxu0
        %616 = vmatprep.mubr.bf16.mxu0 0
        %617 = vmatmul.mubr.bf16.gmra.mxu0 %v551
        %v618 = vpop.f32.mrf.mxu0
        %v619 = vadd.f32 %v529, %v618
        %v620 = vpop.f32.mrf.mxu0
        %v621 = vpop.f32.mrf.mxu0
        %v622 = vadd.f32 %v529, %v621
        %v623 = vpop.f32.mrf.mxu0
        %624 = vmatprep.mubr.bf16.mxu0 0
        %625 = vmatmul.mubr.bf16.gmra.mxu0 %v554
        %v626 = vpop.f32.mrf.mxu0
        %v627 = vadd.f32 %v529, %v626
        %v628 = vpop.f32.mrf.mxu0
        %v629 = vpop.f32.mrf.mxu0
        %v630 = vadd.f32 %v529, %v629
        %v631 = vpop.f32.mrf.mxu0
        %632 = vmatprep.mubr.bf16.mxu0 0
        %633 = vmatmul.mubr.bf16.gmra.mxu0 %v557
        %v634 = vpop.f32.mrf.mxu0
        %v635 = vadd.f32 %v529, %v634
        %v636 = vpop.f32.mrf.mxu0
        %v637 = vpop.f32.mrf.mxu0
        %v638 = vadd.f32 %v529, %v637
        %v639 = vpop.f32.mrf.mxu0
        %640 = vmatprep.mubr.bf16.mxu0 0
        %641 = vmatmul.mubr.bf16.gmra.mxu0 %v560
        %v642 = vpop.f32.mrf.mxu0
        %v643 = vadd.f32 %v529, %v642
        %v644 = vpop.f32.mrf.mxu0
        %v645 = vpop.f32.mrf.mxu0
        %v646 = vadd.f32 %v529, %v645
        %v647 = vpop.f32.mrf.mxu0
        %648 = vmatprep.mubr.bf16.mxu0 0
        %649 = vmatmul.mubr.bf16.gmra.mxu0 %v563
        %v650 = vpop.f32.mrf.mxu0
        %v651 = vadd.f32 %v529, %v650
        %v652 = vpop.f32.mrf.mxu0
        %v653 = vpop.f32.mrf.mxu0
        %v654 = vadd.f32 %v529, %v653
        %v655 = vpop.f32.mrf.mxu0
        %656 = vmatprep.mubr.bf16.mxu0 0
        %657 = vmatmul.mubr.bf16.gmra.mxu0 %v566
        %v658 = vpop.f32.mrf.mxu0
        %v659 = vadd.f32 %v529, %v658
        %v660 = vpop.f32.mrf.mxu0
        %v661 = vpop.f32.mrf.mxu0
        %v662 = vadd.f32 %v529, %v661
        %v663 = vpop.f32.mrf.mxu0
        %664 = vdwg.mxu0
        %v665 = vmax.f32 %v603, 0.0
        %v666 = vmax.f32 %v606, 0.0
        %v667 = vmax.f32 %v611, 0.0
        %v668 = vmax.f32 %v614, 0.0
        %v669 = vmax.f32 %v619, 0.0
        %v670 = vmax.f32 %v622, 0.0
        %v671 = vmax.f32 %v627, 0.0
        %v672 = vmax.f32 %v630, 0.0
        %v673 = vmax.f32 %v635, 0.0
        %v674 = vmax.f32 %v638, 0.0
        %v675 = vmax.f32 %v643, 0.0
        %v676 = vmax.f32 %v646, 0.0
        %v677 = vmax.f32 %v651, 0.0
        %v678 = vmax.f32 %v654, 0.0
        %v679 = vmax.f32 %v659, 0.0
        %v680 = vmax.f32 %v662, 0.0
        %v681 = vpack.c.bf16 %v666, %v665
        %v682 = vpack.c.bf16 %v668, %v667
        %v683 = vpack.c.bf16 %v670, %v669
        %v684 = vpack.c.bf16 %v672, %v671
        %v685 = vpack.c.bf16 %v674, %v673
        %v686 = vpack.c.bf16 %v676, %v675
        %v687 = vpack.c.bf16 %v678, %v677
        %v688 = vpack.c.bf16 %v680, %v679
        %v689 = vld [vmem:[%s5] sm:$0xf]
        %v690 = vld [vmem:[%s5 + $0x4] sm:$0xf]
        %v691 = vld [vmem:[%s5 + $0x8] sm:$0xf]
        %v692 = vld [vmem:[%s5 + $0xc] sm:$0xf]
        %v693 = vld [vmem:[%s6] sm:$0x1]
        %v695 = vlaneseq
        %v696 = vshrl.u32 %v695, 7
        %v697 = vsub.s32 0, %v696
        %v698 = vrot.slane %v693, %v697
        %v704 = vunpack.c.l.b16 %v689
        %v705 = vunpack.c.l.b16 %v690
        %v706 = vunpack.c.l.b16 %v691
        %v707 = vunpack.c.l.b16 %v692
        %v708 = vpack.c.b16 %v705, %v704
        %v709 = vpack.c.b16 %v707, %v706
        %v713 = vsel %vm543, %v681, 0
        %v716 = vsel %vm543, %v682, 0
        %v719 = vsel %vm543, %v683, 0
        %v722 = vsel %vm543, %v684, 0
        %v725 = vsel %vm543, %v685, 0
        %v728 = vsel %vm543, %v686, 0
        %v731 = vsel %vm543, %v687, 0
        %v734 = vsel %vm543, %v688, 0
        %736 = vmatprep.subr.bf16.mxu0 0
        %737 = vmatpush1.bf16.msra.mxu0 0
        %738 = vmatprep.subr.bf16.mxu0 0
        %739 = vmatpush1.bf16.msra.mxu0 0
        %740 = vmatprep.subr.bf16.mxu0 0
        %741 = vmatpush1.bf16.msra.mxu0 0
        %742 = vmatprep.subr.bf16.mxu0 0
        %743 = vmatpush1.bf16.msra.mxu0 0
        %744 = vmatprep.subr.bf16.mxu0 0
        %745 = vmatpush1.bf16.msra.mxu0 0
        %746 = vmatprep.subr.bf16.mxu0 0
        %747 = vmatpush1.bf16.msra.mxu0 0
        %748 = vmatprep.subr.bf16.mxu0 0
        %749 = vmatpush1.bf16.msra.mxu0 %v709
        %750 = vmatprep.subr.bf16.mxu0 0
        %751 = vmatpush1.bf16.msra.mxu0 %v708
        %752 = vmatprep.subr.bf16.mxu0 0
        %753 = vmatpush2.bf16.msra.mxu0 0
        %754 = vmatprep.subr.bf16.mxu0 0
        %755 = vmatpush2.bf16.msra.mxu0 0
        %756 = vmatprep.subr.bf16.mxu0 0
        %757 = vmatpush2.bf16.msra.mxu0 0
        %758 = vmatprep.subr.bf16.mxu0 0
        %759 = vmatpush2.bf16.msra.mxu0 0
        %760 = vmatprep.subr.bf16.mxu0 0
        %761 = vmatpush2.bf16.msra.mxu0 0
        %762 = vmatprep.subr.bf16.mxu0 0
        %763 = vmatpush2.bf16.msra.mxu0 0
        %764 = vmatprep.subr.bf16.mxu0 0
        %765 = vmatpush2.bf16.msra.mxu0 0
        %766 = vmatprep.subr.bf16.mxu0 0
        %767 = vmatpush2.bf16.msra.mxu0 0
        %768 = vmatprep.mubr.bf16.mxu0 0
        %769 = vmatmul.mubr.bf16.gmra.mxu0 %v713
        %v770 = vpop.f32.mrf.mxu0
        %v771 = vadd.f32 %v698, %v770
        %v772 = vpop.f32.mrf.mxu0
        %v773 = vpop.f32.mrf.mxu0
        %v774 = vadd.f32 %v698, %v773
        %v775 = vpop.f32.mrf.mxu0
        %776 = vmatprep.mubr.bf16.mxu0 0
        %777 = vmatmul.mubr.bf16.gmra.mxu0 %v716
        %v778 = vpop.f32.mrf.mxu0
        %v779 = vadd.f32 %v698, %v778
        %v780 = vpop.f32.mrf.mxu0
        %v781 = vpop.f32.mrf.mxu0
        %v782 = vadd.f32 %v698, %v781
        %v783 = vpop.f32.mrf.mxu0
        %784 = vmatprep.mubr.bf16.mxu0 0
        %785 = vmatmul.mubr.bf16.gmra.mxu0 %v719
        %v786 = vpop.f32.mrf.mxu0
        %v787 = vadd.f32 %v698, %v786
        %v788 = vpop.f32.mrf.mxu0
        %v789 = vpop.f32.mrf.mxu0
        %v790 = vadd.f32 %v698, %v789
        %v791 = vpop.f32.mrf.mxu0
        %792 = vmatprep.mubr.bf16.mxu0 0
        %793 = vmatmul.mubr.bf16.gmra.mxu0 %v722
        %v794 = vpop.f32.mrf.mxu0
        %v795 = vadd.f32 %v698, %v794
        %v796 = vpop.f32.mrf.mxu0
        %v797 = vpop.f32.mrf.mxu0
        %v798 = vadd.f32 %v698, %v797
        %v799 = vpop.f32.mrf.mxu0
        %800 = vmatprep.mubr.bf16.mxu0 0
        %801 = vmatmul.mubr.bf16.gmra.mxu0 %v725
        %v802 = vpop.f32.mrf.mxu0
        %v803 = vadd.f32 %v698, %v802
        %v804 = vpop.f32.mrf.mxu0
        %v805 = vpop.f32.mrf.mxu0
        %v806 = vadd.f32 %v698, %v805
        %v807 = vpop.f32.mrf.mxu0
        %808 = vmatprep.mubr.bf16.mxu0 0
        %809 = vmatmul.mubr.bf16.gmra.mxu0 %v728
        %v810 = vpop.f32.mrf.mxu0
        %v811 = vadd.f32 %v698, %v810
        %v812 = vpop.f32.mrf.mxu0
        %v813 = vpop.f32.mrf.mxu0
        %v814 = vadd.f32 %v698, %v813
        %v815 = vpop.f32.mrf.mxu0
        %816 = vmatprep.mubr.bf16.mxu0 0
        %817 = vmatmul.mubr.bf16.gmra.mxu0 %v731
        %v818 = vpop.f32.mrf.mxu0
        %v819 = vadd.f32 %v698, %v818
        %v820 = vpop.f32.mrf.mxu0
        %v821 = vpop.f32.mrf.mxu0
        %v822 = vadd.f32 %v698, %v821
        %v823 = vpop.f32.mrf.mxu0
        %824 = vmatprep.mubr.bf16.mxu0 0
        %825 = vmatmul.mubr.bf16.gmra.mxu0 %v734
        %v826 = vpop.f32.mrf.mxu0
        %v827 = vadd.f32 %v698, %v826
        %v828 = vpop.f32.mrf.mxu0
        %v829 = vpop.f32.mrf.mxu0
        %v830 = vadd.f32 %v698, %v829
        %v831 = vpop.f32.mrf.mxu0
        %832 = vdwg.mxu0
        %v833 = vadd.f32 %v771, %v496
        %v834 = vadd.f32 %v774, %v497
        %v835 = vadd.f32 %v779, %v498
        %v836 = vadd.f32 %v782, %v499
        %v837 = vadd.f32 %v787, %v500
        %v838 = vadd.f32 %v790, %v501
        %v839 = vadd.f32 %v795, %v502
        %v840 = vadd.f32 %v798, %v503
        %v841 = vadd.f32 %v803, %v504
        %v842 = vadd.f32 %v806, %v505
        %v843 = vadd.f32 %v811, %v506
        %v844 = vadd.f32 %v814, %v507
        %v845 = vadd.f32 %v819, %v508
        %v846 = vadd.f32 %v822, %v509
        %v847 = vadd.f32 %v827, %v510
        %v848 = vadd.f32 %v830, %v511
        %v849 = vmax.f32 %v833, 0.0
        %v850 = vmax.f32 %v834, 0.0
        %v851 = vmax.f32 %v835, 0.0
        %v852 = vmax.f32 %v836, 0.0
        %v853 = vmax.f32 %v837, 0.0
        %v854 = vmax.f32 %v838, 0.0
        %v855 = vmax.f32 %v839, 0.0
        %v856 = vmax.f32 %v840, 0.0
        %v857 = vmax.f32 %v841, 0.0
        %v858 = vmax.f32 %v842, 0.0
        %v859 = vmax.f32 %v843, 0.0
        %v860 = vmax.f32 %v844, 0.0
        %v861 = vmax.f32 %v845, 0.0
        %v862 = vmax.f32 %v846, 0.0
        %v863 = vmax.f32 %v847, 0.0
        %v864 = vmax.f32 %v848, 0.0
        %v865 = vpack.c.bf16 %v850, %v849
        %v866 = vpack.c.bf16 %v852, %v851
        %v867 = vpack.c.bf16 %v854, %v853
        %v868 = vpack.c.bf16 %v856, %v855
        %v869 = vpack.c.bf16 %v858, %v857
        %v870 = vpack.c.bf16 %v860, %v859
        %v871 = vpack.c.bf16 %v862, %v861
        %v872 = vpack.c.bf16 %v864, %v863
        %s873 = scalar_lea.vmem %s3, 16
        %v874 = vld [vmem:[%s873] sm:$0xf]
        %v875 = vld [vmem:[%s873 + $0x4] sm:$0xf]
        %v876 = vld [vmem:[%s873 + $0x8] sm:$0xf]
        %v877 = vld [vmem:[%s873 + $0xc] sm:$0xf]
        %s878 = scalar_lea.vmem %s4, 1
        %v879 = vld [vmem:[%s878] sm:$0x1]
        %v881 = vlaneseq
        %v882 = vshrl.u32 %v881, 7
        %v883 = vsub.s32 0, %v882
        %v884 = vrot.slane %v879, %v883
        %v890 = vunpack.c.l.b16 %v874
        %v891 = vunpack.c.l.b16 %v875
        %v892 = vunpack.c.l.b16 %v876
        %v893 = vunpack.c.l.b16 %v877
        %v894 = vpack.c.b16 %v891, %v890
        %v895 = vpack.c.b16 %v893, %v892
        %v899 = vsel %vm543, %v865, 0
        %v902 = vsel %vm543, %v866, 0
        %v905 = vsel %vm543, %v867, 0
        %v908 = vsel %vm543, %v868, 0
        %v911 = vsel %vm543, %v869, 0
        %v914 = vsel %vm543, %v870, 0
        %v917 = vsel %vm543, %v871, 0
        %v920 = vsel %vm543, %v872, 0
        %922 = vmatprep.subr.bf16.mxu0 0
        %923 = vmatpush1.bf16.msra.mxu0 0
        %924 = vmatprep.subr.bf16.mxu0 0
        %925 = vmatpush1.bf16.msra.mxu0 0
        %926 = vmatprep.subr.bf16.mxu0 0
        %927 = vmatpush1.bf16.msra.mxu0 0
        %928 = vmatprep.subr.bf16.mxu0 0
        %929 = vmatpush1.bf16.msra.mxu0 0
        %930 = vmatprep.subr.bf16.mxu0 0
        %931 = vmatpush1.bf16.msra.mxu0 0
        %932 = vmatprep.subr.bf16.mxu0 0
        %933 = vmatpush1.bf16.msra.mxu0 0
        %934 = vmatprep.subr.bf16.mxu0 0
        %935 = vmatpush1.bf16.msra.mxu0 %v895
        %936 = vmatprep.subr.bf16.mxu0 0
        %937 = vmatpush1.bf16.msra.mxu0 %v894
        %938 = vmatprep.subr.bf16.mxu0 0
        %939 = vmatpush2.bf16.msra.mxu0 0
        %940 = vmatprep.subr.bf16.mxu0 0
        %941 = vmatpush2.bf16.msra.mxu0 0
        %942 = vmatprep.subr.bf16.mxu0 0
        %943 = vmatpush2.bf16.msra.mxu0 0
        %944 = vmatprep.subr.bf16.mxu0 0
        %945 = vmatpush2.bf16.msra.mxu0 0
        %946 = vmatprep.subr.bf16.mxu0 0
        %947 = vmatpush2.bf16.msra.mxu0 0
        %948 = vmatprep.subr.bf16.mxu0 0
        %949 = vmatpush2.bf16.msra.mxu0 0
        %950 = vmatprep.subr.bf16.mxu0 0
        %951 = vmatpush2.bf16.msra.mxu0 0
        %952 = vmatprep.subr.bf16.mxu0 0
        %953 = vmatpush2.bf16.msra.mxu0 0
        %954 = vmatprep.mubr.bf16.mxu0 0
        %955 = vmatmul.mubr.bf16.gmra.mxu0 %v899
        %v956 = vpop.f32.mrf.mxu0
        %v957 = vadd.f32 %v884, %v956
        %v958 = vpop.f32.mrf.mxu0
        %v959 = vpop.f32.mrf.mxu0
        %v960 = vadd.f32 %v884, %v959
        %v961 = vpop.f32.mrf.mxu0
        %962 = vmatprep.mubr.bf16.mxu0 0
        %963 = vmatmul.mubr.bf16.gmra.mxu0 %v902
        %v964 = vpop.f32.mrf.mxu0
        %v965 = vadd.f32 %v884, %v964
        %v966 = vpop.f32.mrf.mxu0
        %v967 = vpop.f32.mrf.mxu0
        %v968 = vadd.f32 %v884, %v967
        %v969 = vpop.f32.mrf.mxu0
        %970 = vmatprep.mubr.bf16.mxu0 0
        %971 = vmatmul.mubr.bf16.gmra.mxu0 %v905
        %v972 = vpop.f32.mrf.mxu0
        %v973 = vadd.f32 %v884, %v972
        %v974 = vpop.f32.mrf.mxu0
        %v975 = vpop.f32.mrf.mxu0
        %v976 = vadd.f32 %v884, %v975
        %v977 = vpop.f32.mrf.mxu0
        %978 = vmatprep.mubr.bf16.mxu0 0
        %979 = vmatmul.mubr.bf16.gmra.mxu0 %v908
        %v980 = vpop.f32.mrf.mxu0
        %v981 = vadd.f32 %v884, %v980
        %v982 = vpop.f32.mrf.mxu0
        %v983 = vpop.f32.mrf.mxu0
        %v984 = vadd.f32 %v884, %v983
        %v985 = vpop.f32.mrf.mxu0
        %986 = vmatprep.mubr.bf16.mxu0 0
        %987 = vmatmul.mubr.bf16.gmra.mxu0 %v911
        %v988 = vpop.f32.mrf.mxu0
        %v989 = vadd.f32 %v884, %v988
        %v990 = vpop.f32.mrf.mxu0
        %v991 = vpop.f32.mrf.mxu0
        %v992 = vadd.f32 %v884, %v991
        %v993 = vpop.f32.mrf.mxu0
        %994 = vmatprep.mubr.bf16.mxu0 0
        %995 = vmatmul.mubr.bf16.gmra.mxu0 %v914
        %v996 = vpop.f32.mrf.mxu0
        %v997 = vadd.f32 %v884, %v996
        %v998 = vpop.f32.mrf.mxu0
        %v999 = vpop.f32.mrf.mxu0
        %v1000 = vadd.f32 %v884, %v999
        %v1001 = vpop.f32.mrf.mxu0
        %1002 = vmatprep.mubr.bf16.mxu0 0
        %1003 = vmatmul.mubr.bf16.gmra.mxu0 %v917
        %v1004 = vpop.f32.mrf.mxu0
        %v1005 = vadd.f32 %v884, %v1004
        %v1006 = vpop.f32.mrf.mxu0
        %v1007 = vpop.f32.mrf.mxu0
        %v1008 = vadd.f32 %v884, %v1007
        %v1009 = vpop.f32.mrf.mxu0
        %1010 = vmatprep.mubr.bf16.mxu0 0
        %1011 = vmatmul.mubr.bf16.gmra.mxu0 %v920
        %v1012 = vpop.f32.mrf.mxu0
        %v1013 = vadd.f32 %v884, %v1012
        %v1014 = vpop.f32.mrf.mxu0
        %v1015 = vpop.f32.mrf.mxu0
        %v1016 = vadd.f32 %v884, %v1015
        %v1017 = vpop.f32.mrf.mxu0
        %1018 = vdwg.mxu0
        %v1019 = vmax.f32 %v957, 0.0
        %v1020 = vmax.f32 %v960, 0.0
        %v1021 = vmax.f32 %v965, 0.0
        %v1022 = vmax.f32 %v968, 0.0
        %v1023 = vmax.f32 %v973, 0.0
        %v1024 = vmax.f32 %v976, 0.0
        %v1025 = vmax.f32 %v981, 0.0
        %v1026 = vmax.f32 %v984, 0.0
        %v1027 = vmax.f32 %v989, 0.0
        %v1028 = vmax.f32 %v992, 0.0
        %v1029 = vmax.f32 %v997, 0.0
        %v1030 = vmax.f32 %v1000, 0.0
        %v1031 = vmax.f32 %v1005, 0.0
        %v1032 = vmax.f32 %v1008, 0.0
        %v1033 = vmax.f32 %v1013, 0.0
        %v1034 = vmax.f32 %v1016, 0.0
        %v1035 = vpack.c.bf16 %v1020, %v1019
        %v1036 = vpack.c.bf16 %v1022, %v1021
        %v1037 = vpack.c.bf16 %v1024, %v1023
        %v1038 = vpack.c.bf16 %v1026, %v1025
        %v1039 = vpack.c.bf16 %v1028, %v1027
        %v1040 = vpack.c.bf16 %v1030, %v1029
        %v1041 = vpack.c.bf16 %v1032, %v1031
        %v1042 = vpack.c.bf16 %v1034, %v1033
        %s1043 = scalar_lea.vmem %s5, 16
        %v1044 = vld [vmem:[%s1043] sm:$0xf]
        %v1045 = vld [vmem:[%s1043 + $0x4] sm:$0xf]
        %v1046 = vld [vmem:[%s1043 + $0x8] sm:$0xf]
        %v1047 = vld [vmem:[%s1043 + $0xc] sm:$0xf]
        %s1048 = scalar_lea.vmem %s6, 1
        %v1049 = vld [vmem:[%s1048] sm:$0x1]
        %v1051 = vlaneseq
        %v1052 = vshrl.u32 %v1051, 7
        %v1053 = vsub.s32 0, %v1052
        %v1054 = vrot.slane %v1049, %v1053
        %v1060 = vunpack.c.l.b16 %v1044
        %v1061 = vunpack.c.l.b16 %v1045
        %v1062 = vunpack.c.l.b16 %v1046
        %v1063 = vunpack.c.l.b16 %v1047
        %v1064 = vpack.c.b16 %v1061, %v1060
        %v1065 = vpack.c.b16 %v1063, %v1062
        %v1069 = vsel %vm543, %v1035, 0
        %v1072 = vsel %vm543, %v1036, 0
        %v1075 = vsel %vm543, %v1037, 0
        %v1078 = vsel %vm543, %v1038, 0
        %v1081 = vsel %vm543, %v1039, 0
        %v1084 = vsel %vm543, %v1040, 0
        %v1087 = vsel %vm543, %v1041, 0
        %v1090 = vsel %vm543, %v1042, 0
        %1092 = vmatprep.subr.bf16.mxu0 0
        %1093 = vmatpush1.bf16.msra.mxu0 0
        %1094 = vmatprep.subr.bf16.mxu0 0
        %1095 = vmatpush1.bf16.msra.mxu0 0
        %1096 = vmatprep.subr.bf16.mxu0 0
        %1097 = vmatpush1.bf16.msra.mxu0 0
        %1098 = vmatprep.subr.bf16.mxu0 0
        %1099 = vmatpush1.bf16.msra.mxu0 0
        %1100 = vmatprep.subr.bf16.mxu0 0
        %1101 = vmatpush1.bf16.msra.mxu0 0
        %1102 = vmatprep.subr.bf16.mxu0 0
        %1103 = vmatpush1.bf16.msra.mxu0 0
        %1104 = vmatprep.subr.bf16.mxu0 0
        %1105 = vmatpush1.bf16.msra.mxu0 %v1065
        %1106 = vmatprep.subr.bf16.mxu0 0
        %1107 = vmatpush1.bf16.msra.mxu0 %v1064
        %1108 = vmatprep.subr.bf16.mxu0 0
        %1109 = vmatpush2.bf16.msra.mxu0 0
        %1110 = vmatprep.subr.bf16.mxu0 0
        %1111 = vmatpush2.bf16.msra.mxu0 0
        %1112 = vmatprep.subr.bf16.mxu0 0
        %1113 = vmatpush2.bf16.msra.mxu0 0
        %1114 = vmatprep.subr.bf16.mxu0 0
        %1115 = vmatpush2.bf16.msra.mxu0 0
        %1116 = vmatprep.subr.bf16.mxu0 0
        %1117 = vmatpush2.bf16.msra.mxu0 0
        %1118 = vmatprep.subr.bf16.mxu0 0
        %1119 = vmatpush2.bf16.msra.mxu0 0
        %1120 = vmatprep.subr.bf16.mxu0 0
        %1121 = vmatpush2.bf16.msra.mxu0 0
        %1122 = vmatprep.subr.bf16.mxu0 0
        %1123 = vmatpush2.bf16.msra.mxu0 0
        %1124 = vmatprep.mubr.bf16.mxu0 0
        %1125 = vmatmul.mubr.bf16.gmra.mxu0 %v1069
        %v1126 = vpop.f32.mrf.mxu0
        %v1127 = vadd.f32 %v1054, %v1126
        %v1128 = vpop.f32.mrf.mxu0
        %v1129 = vpop.f32.mrf.mxu0
        %v1130 = vadd.f32 %v1054, %v1129
        %v1131 = vpop.f32.mrf.mxu0
        %1132 = vmatprep.mubr.bf16.mxu0 0
        %1133 = vmatmul.mubr.bf16.gmra.mxu0 %v1072
        %v1134 = vpop.f32.mrf.mxu0
        %v1135 = vadd.f32 %v1054, %v1134
        %v1136 = vpop.f32.mrf.mxu0
        %v1137 = vpop.f32.mrf.mxu0
        %v1138 = vadd.f32 %v1054, %v1137
        %v1139 = vpop.f32.mrf.mxu0
        %1140 = vmatprep.mubr.bf16.mxu0 0
        %1141 = vmatmul.mubr.bf16.gmra.mxu0 %v1075
        %v1142 = vpop.f32.mrf.mxu0
        %v1143 = vadd.f32 %v1054, %v1142
        %v1144 = vpop.f32.mrf.mxu0
        %v1145 = vpop.f32.mrf.mxu0
        %v1146 = vadd.f32 %v1054, %v1145
        %v1147 = vpop.f32.mrf.mxu0
        %1148 = vmatprep.mubr.bf16.mxu0 0
        %1149 = vmatmul.mubr.bf16.gmra.mxu0 %v1078
        %v1150 = vpop.f32.mrf.mxu0
        %v1151 = vadd.f32 %v1054, %v1150
        %v1152 = vpop.f32.mrf.mxu0
        %v1153 = vpop.f32.mrf.mxu0
        %v1154 = vadd.f32 %v1054, %v1153
        %v1155 = vpop.f32.mrf.mxu0
        %1156 = vmatprep.mubr.bf16.mxu0 0
        %1157 = vmatmul.mubr.bf16.gmra.mxu0 %v1081
        %v1158 = vpop.f32.mrf.mxu0
        %v1159 = vadd.f32 %v1054, %v1158
        %v1160 = vpop.f32.mrf.mxu0
        %v1161 = vpop.f32.mrf.mxu0
        %v1162 = vadd.f32 %v1054, %v1161
        %v1163 = vpop.f32.mrf.mxu0
        %1164 = vmatprep.mubr.bf16.mxu0 0
        %1165 = vmatmul.mubr.bf16.gmra.mxu0 %v1084
        %v1166 = vpop.f32.mrf.mxu0
        %v1167 = vadd.f32 %v1054, %v1166
        %v1168 = vpop.f32.mrf.mxu0
        %v1169 = vpop.f32.mrf.mxu0
        %v1170 = vadd.f32 %v1054, %v1169
        %v1171 = vpop.f32.mrf.mxu0
        %1172 = vmatprep.mubr.bf16.mxu0 0
        %1173 = vmatmul.mubr.bf16.gmra.mxu0 %v1087
        %v1174 = vpop.f32.mrf.mxu0
        %v1175 = vadd.f32 %v1054, %v1174
        %v1176 = vpop.f32.mrf.mxu0
        %v1177 = vpop.f32.mrf.mxu0
        %v1178 = vadd.f32 %v1054, %v1177
        %v1179 = vpop.f32.mrf.mxu0
        %1180 = vmatprep.mubr.bf16.mxu0 0
        %1181 = vmatmul.mubr.bf16.gmra.mxu0 %v1090
        %v1182 = vpop.f32.mrf.mxu0
        %v1183 = vadd.f32 %v1054, %v1182
        %v1184 = vpop.f32.mrf.mxu0
        %v1185 = vpop.f32.mrf.mxu0
        %v1186 = vadd.f32 %v1054, %v1185
        %v1187 = vpop.f32.mrf.mxu0
        %1188 = vdwg.mxu0
        %v1189 = vadd.f32 %v1127, %v849
        %v1190 = vadd.f32 %v1130, %v850
        %v1191 = vadd.f32 %v1135, %v851
        %v1192 = vadd.f32 %v1138, %v852
        %v1193 = vadd.f32 %v1143, %v853
        %v1194 = vadd.f32 %v1146, %v854
        %v1195 = vadd.f32 %v1151, %v855
        %v1196 = vadd.f32 %v1154, %v856
        %v1197 = vadd.f32 %v1159, %v857
        %v1198 = vadd.f32 %v1162, %v858
        %v1199 = vadd.f32 %v1167, %v859
        %v1200 = vadd.f32 %v1170, %v860
        %v1201 = vadd.f32 %v1175, %v861
        %v1202 = vadd.f32 %v1178, %v862
        %v1203 = vadd.f32 %v1183, %v863
        %v1204 = vadd.f32 %v1186, %v864
        %v1205 = vmax.f32 %v1189, 0.0
        %v1206 = vmax.f32 %v1190, 0.0
        %v1207 = vmax.f32 %v1191, 0.0
        %v1208 = vmax.f32 %v1192, 0.0
        %v1209 = vmax.f32 %v1193, 0.0
        %v1210 = vmax.f32 %v1194, 0.0
        %v1211 = vmax.f32 %v1195, 0.0
        %v1212 = vmax.f32 %v1196, 0.0
        %v1213 = vmax.f32 %v1197, 0.0
        %v1214 = vmax.f32 %v1198, 0.0
        %v1215 = vmax.f32 %v1199, 0.0
        %v1216 = vmax.f32 %v1200, 0.0
        %v1217 = vmax.f32 %v1201, 0.0
        %v1218 = vmax.f32 %v1202, 0.0
        %v1219 = vmax.f32 %v1203, 0.0
        %v1220 = vmax.f32 %v1204, 0.0
        %v1221 = vpack.c.bf16 %v1206, %v1205
        %v1222 = vpack.c.bf16 %v1208, %v1207
        %v1223 = vpack.c.bf16 %v1210, %v1209
        %v1224 = vpack.c.bf16 %v1212, %v1211
        %v1225 = vpack.c.bf16 %v1214, %v1213
        %v1226 = vpack.c.bf16 %v1216, %v1215
        %v1227 = vpack.c.bf16 %v1218, %v1217
        %v1228 = vpack.c.bf16 %v1220, %v1219
        %v1229 = vld [vmem:[%s7] sm:$0xf]
        %v1230 = vld [vmem:[%s7 + $0x4] sm:$0xf]
        %v1231 = vld [vmem:[%s7 + $0x8] sm:$0xf]
        %v1232 = vld [vmem:[%s7 + $0xc] sm:$0xf]
        %v1233 = vld [vmem:[%s8] sm:$0x1]
        %v1235 = vlaneseq
        %v1236 = vshrl.u32 %v1235, 7
        %v1237 = vsub.s32 0, %v1236
        %v1238 = vrot.slane %v1233, %v1237
        %v1244 = vunpack.c.l.b16 %v1229
        %v1245 = vunpack.c.l.b16 %v1230
        %v1246 = vunpack.c.l.b16 %v1231
        %v1247 = vunpack.c.l.b16 %v1232
        %v1248 = vpack.c.b16 %v1245, %v1244
        %v1249 = vpack.c.b16 %v1247, %v1246
        %v1253 = vsel %vm543, %v1221, 0
        %v1256 = vsel %vm543, %v1222, 0
        %v1259 = vsel %vm543, %v1223, 0
        %v1262 = vsel %vm543, %v1224, 0
        %v1265 = vsel %vm543, %v1225, 0
        %v1268 = vsel %vm543, %v1226, 0
        %v1271 = vsel %vm543, %v1227, 0
        %v1274 = vsel %vm543, %v1228, 0
        %1276 = vmatprep.subr.bf16.mxu0 0
        %1277 = vmatpush1.bf16.msra.mxu0 0
        %1278 = vmatprep.subr.bf16.mxu0 0
        %1279 = vmatpush1.bf16.msra.mxu0 0
        %1280 = vmatprep.subr.bf16.mxu0 0
        %1281 = vmatpush1.bf16.msra.mxu0 0
        %1282 = vmatprep.subr.bf16.mxu0 0
        %1283 = vmatpush1.bf16.msra.mxu0 0
        %1284 = vmatprep.subr.bf16.mxu0 0
        %1285 = vmatpush1.bf16.msra.mxu0 0
        %1286 = vmatprep.subr.bf16.mxu0 0
        %1287 = vmatpush1.bf16.msra.mxu0 0
        %1288 = vmatprep.subr.bf16.mxu0 0
        %1289 = vmatpush1.bf16.msra.mxu0 %v1249
        %1290 = vmatprep.subr.bf16.mxu0 0
        %1291 = vmatpush1.bf16.msra.mxu0 %v1248
        %1292 = vmatprep.subr.bf16.mxu0 0
        %1293 = vmatpush2.bf16.msra.mxu0 0
        %1294 = vmatprep.subr.bf16.mxu0 0
        %1295 = vmatpush2.bf16.msra.mxu0 0
        %1296 = vmatprep.subr.bf16.mxu0 0
        %1297 = vmatpush2.bf16.msra.mxu0 0
        %1298 = vmatprep.subr.bf16.mxu0 0
        %1299 = vmatpush2.bf16.msra.mxu0 0
        %1300 = vmatprep.subr.bf16.mxu0 0
        %1301 = vmatpush2.bf16.msra.mxu0 0
        %1302 = vmatprep.subr.bf16.mxu0 0
        %1303 = vmatpush2.bf16.msra.mxu0 0
        %1304 = vmatprep.subr.bf16.mxu0 0
        %1305 = vmatpush2.bf16.msra.mxu0 0
        %1306 = vmatprep.subr.bf16.mxu0 0
        %1307 = vmatpush2.bf16.msra.mxu0 0
        %1308 = vmatprep.mubr.bf16.mxu0 0
        %1309 = vmatmul.mubr.bf16.gmra.mxu0 %v1253
        %v1310 = vpop.f32.mrf.mxu0
        %v1311 = vadd.f32 %v1238, %v1310
        %v1312 = vpop.f32.mrf.mxu0
        %v1313 = vpop.f32.mrf.mxu0
        %v1314 = vadd.f32 %v1238, %v1313
        %v1315 = vpop.f32.mrf.mxu0
        %1316 = vmatprep.mubr.bf16.mxu0 0
        %1317 = vmatmul.mubr.bf16.gmra.mxu0 %v1256
        %v1318 = vpop.f32.mrf.mxu0
        %v1319 = vadd.f32 %v1238, %v1318
        %v1320 = vpop.f32.mrf.mxu0
        %v1321 = vpop.f32.mrf.mxu0
        %v1322 = vadd.f32 %v1238, %v1321
        %v1323 = vpop.f32.mrf.mxu0
        %1324 = vmatprep.mubr.bf16.mxu0 0
        %1325 = vmatmul.mubr.bf16.gmra.mxu0 %v1259
        %v1326 = vpop.f32.mrf.mxu0
        %v1327 = vadd.f32 %v1238, %v1326
        %v1328 = vpop.f32.mrf.mxu0
        %v1329 = vpop.f32.mrf.mxu0
        %v1330 = vadd.f32 %v1238, %v1329
        %v1331 = vpop.f32.mrf.mxu0
        %1332 = vmatprep.mubr.bf16.mxu0 0
        %1333 = vmatmul.mubr.bf16.gmra.mxu0 %v1262
        %v1334 = vpop.f32.mrf.mxu0
        %v1335 = vadd.f32 %v1238, %v1334
        %v1336 = vpop.f32.mrf.mxu0
        %v1337 = vpop.f32.mrf.mxu0
        %v1338 = vadd.f32 %v1238, %v1337
        %v1339 = vpop.f32.mrf.mxu0
        %1340 = vmatprep.mubr.bf16.mxu0 0
        %1341 = vmatmul.mubr.bf16.gmra.mxu0 %v1265
        %v1342 = vpop.f32.mrf.mxu0
        %v1343 = vadd.f32 %v1238, %v1342
        %v1344 = vpop.f32.mrf.mxu0
        %v1345 = vpop.f32.mrf.mxu0
        %v1346 = vadd.f32 %v1238, %v1345
        %v1347 = vpop.f32.mrf.mxu0
        %1348 = vmatprep.mubr.bf16.mxu0 0
        %1349 = vmatmul.mubr.bf16.gmra.mxu0 %v1268
        %v1350 = vpop.f32.mrf.mxu0
        %v1351 = vadd.f32 %v1238, %v1350
        %v1352 = vpop.f32.mrf.mxu0
        %v1353 = vpop.f32.mrf.mxu0
        %v1354 = vadd.f32 %v1238, %v1353
        %v1355 = vpop.f32.mrf.mxu0
        %1356 = vmatprep.mubr.bf16.mxu0 0
        %1357 = vmatmul.mubr.bf16.gmra.mxu0 %v1271
        %v1358 = vpop.f32.mrf.mxu0
        %v1359 = vadd.f32 %v1238, %v1358
        %v1360 = vpop.f32.mrf.mxu0
        %v1361 = vpop.f32.mrf.mxu0
        %v1362 = vadd.f32 %v1238, %v1361
        %v1363 = vpop.f32.mrf.mxu0
        %1364 = vmatprep.mubr.bf16.mxu0 0
        %1365 = vmatmul.mubr.bf16.gmra.mxu0 %v1274
        %v1366 = vpop.f32.mrf.mxu0
        %v1367 = vadd.f32 %v1238, %v1366
        %v1368 = vpop.f32.mrf.mxu0
        %v1369 = vpop.f32.mrf.mxu0
        %v1370 = vadd.f32 %v1238, %v1369
        %v1371 = vpop.f32.mrf.mxu0
        %1372 = vdwg.mxu0
        %1373 = vst [vmem:[%s326] sm:$0xff] %v1311
        %1374 = vst [vmem:[%s326 + $0x8] sm:$0xff] %v1314
        %1375 = vst [vmem:[%s326 + $0x10] sm:$0xff] %v1319
        %1376 = vst [vmem:[%s326 + $0x18] sm:$0xff] %v1322
        %1377 = vst [vmem:[%s326 + $0x20] sm:$0xff] %v1327
        %1378 = vst [vmem:[%s326 + $0x28] sm:$0xff] %v1330
        %1379 = vst [vmem:[%s326 + $0x30] sm:$0xff] %v1335
        %1380 = vst [vmem:[%s326 + $0x38] sm:$0xff] %v1338
        %1381 = vst [vmem:[%s326 + $0x40] sm:$0xff] %v1343
        %1382 = vst [vmem:[%s326 + $0x48] sm:$0xff] %v1346
        %1383 = vst [vmem:[%s326 + $0x50] sm:$0xff] %v1351
        %1384 = vst [vmem:[%s326 + $0x58] sm:$0xff] %v1354
        %1385 = vst [vmem:[%s326 + $0x60] sm:$0xff] %v1359
        %1386 = vst [vmem:[%s326 + $0x68] sm:$0xff] %v1362
        %1387 = vst [vmem:[%s326 + $0x70] sm:$0xff] %v1367
        %1388 = vst [vmem:[%s326 + $0x78] sm:$0xff] %v1370
        %s1389 = sand.u32 %s225, 1
        %s1390 = scalar_lea.sflag [#allocation3], %s1389
        %s1391 = sand.u32 %s225, 1
        %s1392 = smul.addr %s1391, 128
        %s1393 = scalar_lea.vmem [#allocation2], %s1392
        // Predicated region
        $region57: #{tpu_custom_call.1} parent=55 // pred_check
          %p1394 = pneg %p235
        $region58: #{tpu_custom_call.1} parent=55 // pred_check_branch
          %1396 = sbr.rel (%p1394) target = $region60
        $region59: #{tpu_custom_call.1} parent=55 // pred_region
          %s1397 = smul.u32 16, %s23
          %s1399 = ssub.s32 2048, 2048
          %1400 = vsyncadd %s1390, %s1399
          %s1401 = smul.addr %s1397, 128
          %s1402 = scalar_lea.hbm %s9, %s1401
          %s1403 = sshll.u32 %s1393, 4
          %s1404 = int_to_ptr.vmem [resolvable:$true] %s1403
          %1409 = dma.vmem_to_hbm [thread:$0]  %s1404, 2048, %s1402, %s1390, 128, 128, 8
        $region60: #{tpu_custom_call.1} parent=55 // pred_fallthru
          _
      $region56: #{tpu_custom_call.1} parent=5 // pred_fallthru
        _
      %p1410 = scmp.le.s32.totalorder 2, %s18
      // Predicated region
      $region61: #{tpu_custom_call.1} parent=5 // pred_check
        %p1411 = pneg %p1410
      $region62: #{tpu_custom_call.1} parent=5 // pred_check_branch
        %1413 = sbr.rel (%p1411) target = $region64
      $region63: #{tpu_custom_call.1} parent=5 // pred_region
        %s1414 = ssub.s32 %s18, 2
        // Predicated region
        $region65: #{tpu_custom_call.1} parent=63 // pred_check
          %p1415 = pneg %p241
        $region66: #{tpu_custom_call.1} parent=63 // pred_check_branch
          %1417 = sbr.rel (%p1415) target = $region68
        $region67: #{tpu_custom_call.1} parent=63 // pred_region
          %s1418 = sand.u32 %s226, 1
          %s1419 = scalar_lea.sflag [#allocation3], %s1418
          %s1420 = sand.u32 %s226, 1
          %s1421 = smul.addr %s1420, 128
          %s1422 = scalar_lea.vmem [#allocation2], %s1421
          %1423 = dma.done %s1419, 2048
        $region68: #{tpu_custom_call.1} parent=63 // pred_fallthru
          _
      $region64: #{tpu_custom_call.1} parent=5 // pred_fallthru
        _
    $region6: #{tpu_custom_call.1} parent=1 // loop_footer
      %s22 = sadd.s32 1, %s18
    $region7: #{tpu_custom_call.1} parent=1 // loop_footer_branch
      %17 = sbr.rel target = $region3
    $region8: #{tpu_custom_call.1} parent=1 // loop_exit
      _
    %1424 = vsyncpa [#allocation3], 1
    %s1425 = scalar_lea.sflag [#allocation3], 1
    %1426 = vsyncpa %s1425, 1

</llo_original>
